<compile_context>
chip_gen: v5e
topology: v5e:2x2
jax: 0.10.0
libtpu: 0.0.40
codegen_flags: <defaults>
</compile_context>

<pallas_src>
import functools

import jax
import jax.numpy as jnp
import numpy as np
from jax.experimental import pallas as pl
from jax.experimental.pallas import tpu as pltpu

EPS = 1e-5


# ------------------------------ fused kernel ---------------------------------

def _fused_bottleneck_kernel(*refs, stride, H, W, cin, mid, cout):
    if stride == 2:
        (x_ref, w1_ref, b1_ref, w2_ref, b2_ref, w3_ref, b3_ref, sel_ref,
         o_ref, pad1, padx) = refs
    else:
        (x_ref, w1_ref, b1_ref, w2_ref, b2_ref, w3_ref, b3_ref,
         o_ref, pad1) = refs

    x = x_ref[0].astype(jnp.float32)                       # (H, W, cin)
    x2d = x.reshape(H * W, cin)

    # conv1: grouped 1x1 as block-diagonal matmul; BN1 scale + channel shuffle
    # already folded into w1/b1.  + ReLU.
    h1 = jnp.dot(x2d, w1_ref[...], preferred_element_type=jnp.float32) + b1_ref[...]
    h1 = jnp.maximum(h1, 0.0)                              # (H*W, mid)

    # conv2: 3x3 depthwise, zero halo via VMEM scratch, BN2 scale folded, +ReLU
    pad1[...] = jnp.zeros_like(pad1)
    pad1[1:H + 1, 1:W + 1, :] = h1.reshape(H, W, mid)
    w2 = w2_ref[...]                                       # (3, 3, mid)
    acc = jnp.zeros((H, W, mid), jnp.float32)
    for dy in range(3):
        for dx in range(3):
            acc = acc + pad1[dy:dy + H, dx:dx + W, :] * w2[dy, dx].reshape(1, 1, mid)
    h2 = jnp.maximum(acc + b2_ref[...].reshape(1, 1, mid), 0.0)
    h2_2d = h2.reshape(H * W, mid)

    if stride == 2:
        # in-VMEM stride-2 subsample via 0/1 selection matmul (Ho*Wo, H*W)
        sel = sel_ref[...]
        h2_2d = jnp.dot(sel, h2_2d, preferred_element_type=jnp.float32)

    # conv3: grouped 1x1 block-diagonal matmul, BN3 folded (no ReLU yet)
    h3 = jnp.dot(h2_2d, w3_ref[...], preferred_element_type=jnp.float32) + b3_ref[...]

    if stride == 1:
        # residual: relu(out + x)
        out = jnp.maximum(h3 + x2d, 0.0)
        o_ref[0] = out.reshape(H, W, cout).astype(o_ref.dtype)
    else:
        Ho = (H - 1) // 2 + 1
        Wo = (W - 1) // 2 + 1
        # shortcut: AvgPool2d(3, stride=2, padding=1), count_include_pad=True
        # == depthwise conv with 1/9 weights, then the same stride-2 subsample.
        padx[...] = jnp.zeros_like(padx)
        padx[1:H + 1, 1:W + 1, :] = x
        accx = jnp.zeros((H, W, cin), jnp.float32)
        for dy in range(3):
            for dx in range(3):
                accx = accx + padx[dy:dy + H, dx:dx + W, :]
        res = jnp.dot(sel_ref[...], accx.reshape(H * W, cin) * (1.0 / 9.0),
                      preferred_element_type=jnp.float32)  # (Ho*Wo, cin)
        out = jnp.maximum(jnp.concatenate([h3, res], axis=1), 0.0)
        o_ref[0] = out.reshape(Ho, Wo, cout + cin).astype(o_ref.dtype)


# ------------------------- parameters & host-side folding --------------------

def init_params(key, in_planes, out_planes, stride, groups):
    del stride
    mid = out_planes // 4
    g = 1 if in_planes == 24 else groups
    ks = jax.random.split(key, 6)

    def w(k, shape):
        return 0.1 * jax.random.normal(k, shape, jnp.float32)

    def bn(k, c):
        k1, k2, k3, k4 = jax.random.split(k, 4)
        gamma = 1.0 + 0.1 * jax.random.normal(k1, (c,), jnp.float32)
        beta = 0.1 * jax.random.normal(k2, (c,), jnp.float32)
        mean = 0.1 * jax.random.normal(k3, (c,), jnp.float32)
        var = 0.5 + 0.1 * jax.random.uniform(k4, (c,), jnp.float32)
        return gamma, beta, mean, var

    # PyTorch OIHW weight layouts (BatchNorm in inference mode w/ running stats)
    return dict(
        w1=w(ks[0], (mid, in_planes // g, 1, 1)),        # conv1, groups=g
        bn1=bn(ks[1], mid),
        w2=w(ks[2], (mid, 1, 3, 3)),                     # conv2, depthwise
        bn2=bn(ks[3], mid),
        w3=w(ks[4], (out_planes, mid // groups, 1, 1)),  # conv3, groups=groups
        bn3=bn(ks[5], out_planes),
    )


def _bn_fold(p):
    gamma, beta, mean, var = p
    s = gamma / jnp.sqrt(var + EPS)
    b = beta - mean * s
    return s, b


def _dense_grouped_1x1(w_oihw, groups):
    """PyTorch grouped 1x1 OIHW weight -> dense block-diagonal (Cin, Cout)."""
    O, Ig = w_oihw.shape[0], w_oihw.shape[1]
    og = O // groups
    w = w_oihw[:, :, 0, 0]                       # (O, Ig)
    blocks = w.reshape(groups, og, Ig)
    dense = jnp.zeros((Ig * groups, O), w.dtype)
    for gi in range(groups):
        dense = dense.at[gi * Ig:(gi + 1) * Ig, gi * og:(gi + 1) * og].set(
            jnp.transpose(blocks[gi]))
    return dense                                  # out[:, co] = x @ dense[:, co]


def bottleneck_forward(x_nchw, params, *, in_planes, out_planes, stride, groups):
    mid = out_planes // 4
    g = 1 if in_planes == 24 else groups
    N, _, H, W = x_nchw.shape
    Ho = (H - 1) // 2 + 1 if stride == 2 else H
    Wo = (W - 1) // 2 + 1 if stride == 2 else W
    c_total = out_planes + (in_planes if stride == 2 else 0)

    x = jnp.transpose(x_nchw, (0, 2, 3, 1)).astype(jnp.float32)  # NCHW -> NHWC

    # --- one-time weight transforms (BN scale fold + shuffle fold) ---
    s1, b1 = _bn_fold(params['bn1'])
    s2, b2 = _bn_fold(params['bn2'])
    s3, b3 = _bn_fold(params['bn3'])

    w1d = _dense_grouped_1x1(params['w1'], g) * s1[None, :]
    # fold the channel shuffle into conv1's output channel order
    perm = np.arange(mid).reshape(g, mid // g).T.reshape(-1)
    w1d = w1d[:, perm]
    b1v = b1[perm].reshape(1, mid)

    w2 = jnp.transpose(params['w2'][:, 0], (1, 2, 0)) * s2[None, None, :]  # (3,3,mid)
    b2v = b2.reshape(1, mid)

    w3d = _dense_grouped_1x1(params['w3'], groups) * s3[None, :]
    b3v = b3.reshape(1, out_planes)

    kernel = functools.partial(_fused_bottleneck_kernel, stride=stride,
                               H=H, W=W, cin=in_planes, mid=mid, cout=out_planes)

    in_specs = [
        pl.BlockSpec((1, H, W, in_planes), lambda n: (n, 0, 0, 0)),
        pl.BlockSpec((in_planes, mid), lambda n: (0, 0)),
        pl.BlockSpec((1, mid), lambda n: (0, 0)),
        pl.BlockSpec((3, 3, mid), lambda n: (0, 0, 0)),
        pl.BlockSpec((1, mid), lambda n: (0, 0)),
        pl.BlockSpec((mid, out_planes), lambda n: (0, 0)),
        pl.BlockSpec((1, out_planes), lambda n: (0, 0)),
    ]
    args = [x, w1d, b1v, w2, b2v, w3d, b3v]
    scratch = [pltpu.VMEM((H + 2, W + 2, mid), jnp.float32)]

    if stride == 2:
        rows = np.arange(Ho * Wo)
        src = (2 * (rows // Wo)) * W + 2 * (rows % Wo)
        sel = np.zeros((Ho * Wo, H * W), np.float32)
        sel[rows, src] = 1.0
        in_specs.append(pl.BlockSpec((Ho * Wo, H * W), lambda n: (0, 0)))
        args.append(jnp.asarray(sel))
        scratch.append(pltpu.VMEM((H + 2, W + 2, in_planes), jnp.float32))
    else:
        assert in_planes == out_planes, "stride-1 residual needs matching channels"

    y = pl.pallas_call(
        kernel,
        out_shape=jax.ShapeDtypeStruct((N, Ho, Wo, c_total), jnp.float32),
        grid=(N,),
        in_specs=in_specs,
        out_specs=pl.BlockSpec((1, Ho, Wo, c_total), lambda n: (n, 0, 0, 0)),
        scratch_shapes=scratch,
        compiler_params=pltpu.CompilerParams(dimension_semantics=("parallel",)),
    )(*args)

    return jnp.transpose(y, (0, 3, 1, 2))  # NHWC -> NCHW


# -------------------------- pure-JAX reference --------------------------------

def ref_forward(x, params, *, in_planes, out_planes, stride, groups):
    mid = out_planes // 4
    g = 1 if in_planes == 24 else groups

    def conv(xi, w, s, pad, fg):
        return jax.lax.conv_general_dilated(
            xi, w, (s, s), pad, dimension_numbers=('NCHW', 'OIHW', 'NCHW'),
            feature_group_count=fg)

    def bn(xi, p):
        gamma, beta, mean, var = p
        sc = gamma / jnp.sqrt(var + EPS)
        bi = beta - mean * sc
        return xi * sc[None, :, None, None] + bi[None, :, None, None]

    h = jax.nn.relu(bn(conv(x, params['w1'], 1, [(0, 0), (0, 0)], g), params['bn1']))
    N, C, H, W = h.shape
    h = h.reshape(N, g, C // g, H, W).transpose(0, 2, 1, 3, 4).reshape(N, C, H, W)
    h = jax.nn.relu(bn(conv(h, params['w2'], stride, [(1, 1), (1, 1)], mid), params['bn2']))
    out = bn(conv(h, params['w3'], 1, [(0, 0), (0, 0)], groups), params['bn3'])
    if stride == 2:
        summed = jax.lax.reduce_window(x, 0.0, jax.lax.add, (1, 1, 3, 3), (1, 1, 2, 2),
                                       [(0, 0), (0, 0), (1, 1), (1, 1)])
        res = summed / 9.0  # count_include_pad=True
        out = jax.nn.relu(jnp.concatenate([out, res], axis=1))
    else:
        out = jax.nn.relu(out + x)
    return out


# ------------------------------- main -----------------------------------------

if __name__ == "__main__":
    key = jax.random.PRNGKey(0)
    N, H, W = 2, 16, 16
    configs = [
        dict(in_planes=16, out_planes=16, stride=1, groups=2),  # residual-add branch
        dict(in_planes=16, out_planes=32, stride=2, groups=2),  # avgpool + concat branch
    ]
    for i, cfg in enumerate(configs):
        kp, kx = jax.random.split(jax.random.fold_in(key, i))
        params = init_params(kp, **cfg)
        x = jax.random.normal(kx, (N, cfg['in_planes'], H, W), jnp.float32)

        y = bottleneck_forward(x, params, **cfg)
        y = jax.block_until_ready(y)

        y_ref = ref_forward(x, params, **cfg)
        np.testing.assert_allclose(np.asarray(y), np.asarray(y_ref), rtol=2e-4, atol=2e-4)

    print("KERNEL_OK")
</pallas_src>

<mosaic_0001>
module attributes {stable_mosaic.version = 11 : i64} {
  func.func @_fused_bottleneck_kernel(%arg0: i32, %arg1: memref<1x16x16x16xf32, #tpu.memory_space<vmem>>, %arg2: memref<16x4xf32, #tpu.memory_space<vmem>>, %arg3: memref<1x4xf32, #tpu.memory_space<vmem>>, %arg4: memref<3x3x4xf32, #tpu.memory_space<vmem>>, %arg5: memref<1x4xf32, #tpu.memory_space<vmem>>, %arg6: memref<4x16xf32, #tpu.memory_space<vmem>>, %arg7: memref<1x16xf32, #tpu.memory_space<vmem>>, %arg8: memref<1x16x16x16xf32, #tpu.memory_space<vmem>>, %arg9: memref<18x18x4xf32, #tpu.memory_space<vmem>>) attributes {dimension_semantics = [#tpu.dimension_semantics<parallel>], iteration_bounds = array<i64: 2>, scalar_prefetch = 0 : i64, scratch_operands = 1 : i64, tpu.core_type = #tpu.core_type<tc>, window_params = [{transform_indices = @transform_0, window_bounds = array<i64: 1, 16, 16, 16>}, {pipeline_mode = #tpu.pipeline_mode<synchronous>, transform_indices = @transform_1, window_bounds = array<i64: 16, 4>}, {pipeline_mode = #tpu.pipeline_mode<synchronous>, transform_indices = @transform_2, window_bounds = array<i64: 1, 4>}, {pipeline_mode = #tpu.pipeline_mode<synchronous>, transform_indices = @transform_3, window_bounds = array<i64: 3, 3, 4>}, {pipeline_mode = #tpu.pipeline_mode<synchronous>, transform_indices = @transform_4, window_bounds = array<i64: 1, 4>}, {pipeline_mode = #tpu.pipeline_mode<synchronous>, transform_indices = @transform_5, window_bounds = array<i64: 4, 16>}, {pipeline_mode = #tpu.pipeline_mode<synchronous>, transform_indices = @transform_6, window_bounds = array<i64: 1, 16>}, {transform_indices = @transform_7, window_bounds = array<i64: 1, 16, 16, 16>}]} {
    %c0 = arith.constant 0 : index
    %c0_0 = arith.constant 0 : index
    %c0_1 = arith.constant 0 : index
    %c0_2 = arith.constant 0 : index
    %0 = vector.load %arg1[%c0, %c0_0, %c0_1, %c0_2] : memref<1x16x16x16xf32, #tpu.memory_space<vmem>>, vector<1x16x16x16xf32>
    %1 = vector.shape_cast %0 : vector<1x16x16x16xf32> to vector<16x16x16xf32>
    %2 = vector.shape_cast %1 : vector<16x16x16xf32> to vector<256x16xf32>
    %c0_3 = arith.constant 0 : index
    %c0_4 = arith.constant 0 : index
    %3 = vector.load %arg2[%c0_3, %c0_4] : memref<16x4xf32, #tpu.memory_space<vmem>>, vector<16x4xf32>
    %cst = arith.constant dense<0.000000e+00> : vector<256x4xf32>
    %4 = tpu.matmul %2, %3, %cst {dimension_numbers = #tpu.dot_dimension_numbers<[1], [0], [0], [1], [0, 0, 1, 1], [], []>} : vector<256x16xf32>, vector<16x4xf32>, vector<256x4xf32> -> vector<256x4xf32>
    %c0_5 = arith.constant 0 : index
    %c0_6 = arith.constant 0 : index
    %5 = vector.load %arg3[%c0_5, %c0_6] : memref<1x4xf32, #tpu.memory_space<vmem>>, vector<1x4xf32>
    %6 = vector.broadcast %5 : vector<1x4xf32> to vector<256x4xf32>
    %7 = arith.addf %4, %6 : vector<256x4xf32>
    %cst_7 = arith.constant 0.000000e+00 : f32
    %8 = vector.broadcast %cst_7 : f32 to vector<256x4xf32>
    %9 = arith.maximumf %7, %8 : vector<256x4xf32>
    %cst_8 = arith.constant 0.000000e+00 : f32
    %10 = vector.broadcast %cst_8 : f32 to vector<18x18x4xf32>
    %c0_9 = arith.constant 0 : index
    %c0_10 = arith.constant 0 : index
    %c0_11 = arith.constant 0 : index
    %11 = vector.load %arg9[%c0_9, %c0_10, %c0_11] : memref<18x18x4xf32, #tpu.memory_space<vmem>>, vector<18x18x4xf32>
    tpu.vector_store %arg9[%c0_9, %c0_10, %c0_11], %10 {strides = array<i32>} : memref<18x18x4xf32, #tpu.memory_space<vmem>>, vector<18x18x4xf32>,
    %12 = vector.shape_cast %9 : vector<256x4xf32> to vector<16x16x4xf32>
    %c1 = arith.constant 1 : index
    %c1_12 = arith.constant 1 : index
    %c0_13 = arith.constant 0 : index
    %13 = vector.load %arg9[%c1, %c1_12, %c0_13] : memref<18x18x4xf32, #tpu.memory_space<vmem>>, vector<16x16x4xf32>
    tpu.vector_store %arg9[%c1, %c1_12, %c0_13], %12 {strides = array<i32>} : memref<18x18x4xf32, #tpu.memory_space<vmem>>, vector<16x16x4xf32>,
    %c0_14 = arith.constant 0 : index
    %c0_15 = arith.constant 0 : index
    %c0_16 = arith.constant 0 : index
    %14 = vector.load %arg4[%c0_14, %c0_15, %c0_16] : memref<3x3x4xf32, #tpu.memory_space<vmem>>, vector<3x3x4xf32>
    %cst_17 = arith.constant 0.000000e+00 : f32
    %15 = vector.broadcast %cst_17 : f32 to vector<16x16x4xf32>
    %c0_18 = arith.constant 0 : index
    %c0_19 = arith.constant 0 : index
    %c0_20 = arith.constant 0 : index
    %16 = vector.load %arg9[%c0_18, %c0_19, %c0_20] : memref<18x18x4xf32, #tpu.memory_space<vmem>>, vector<16x16x4xf32>
    %17 = vector.extract_strided_slice %14 {offsets = [0, 0, 0], sizes = [1, 1, 4], strides = [1, 1, 1]} : vector<3x3x4xf32> to vector<1x1x4xf32>
    %18 = vector.shape_cast %17 : vector<1x1x4xf32> to vector<4xf32>
    %19 = vector.shape_cast %18 : vector<4xf32> to vector<1x1x4xf32>
    %20 = vector.broadcast %19 : vector<1x1x4xf32> to vector<16x16x4xf32>
    %21 = arith.mulf %16, %20 : vector<16x16x4xf32>
    %22 = arith.addf %15, %21 : vector<16x16x4xf32>
    %c0_21 = arith.constant 0 : index
    %c1_22 = arith.constant 1 : index
    %c0_23 = arith.constant 0 : index
    %23 = vector.load %arg9[%c0_21, %c1_22, %c0_23] : memref<18x18x4xf32, #tpu.memory_space<vmem>>, vector<16x16x4xf32>
    %24 = vector.extract_strided_slice %14 {offsets = [0, 1, 0], sizes = [1, 1, 4], strides = [1, 1, 1]} : vector<3x3x4xf32> to vector<1x1x4xf32>
    %25 = vector.shape_cast %24 : vector<1x1x4xf32> to vector<4xf32>
    %26 = vector.shape_cast %25 : vector<4xf32> to vector<1x1x4xf32>
    %27 = vector.broadcast %26 : vector<1x1x4xf32> to vector<16x16x4xf32>
    %28 = arith.mulf %23, %27 : vector<16x16x4xf32>
    %29 = arith.addf %22, %28 : vector<16x16x4xf32>
    %c0_24 = arith.constant 0 : index
    %c2 = arith.constant 2 : index
    %c0_25 = arith.constant 0 : index
    %30 = vector.load %arg9[%c0_24, %c2, %c0_25] : memref<18x18x4xf32, #tpu.memory_space<vmem>>, vector<16x16x4xf32>
    %31 = vector.extract_strided_slice %14 {offsets = [0, 2, 0], sizes = [1, 1, 4], strides = [1, 1, 1]} : vector<3x3x4xf32> to vector<1x1x4xf32>
    %32 = vector.shape_cast %31 : vector<1x1x4xf32> to vector<4xf32>
    %33 = vector.shape_cast %32 : vector<4xf32> to vector<1x1x4xf32>
    %34 = vector.broadcast %33 : vector<1x1x4xf32> to vector<16x16x4xf32>
    %35 = arith.mulf %30, %34 : vector<16x16x4xf32>
    %36 = arith.addf %29, %35 : vector<16x16x4xf32>
    %c1_26 = arith.constant 1 : index
    %c0_27 = arith.constant 0 : index
    %c0_28 = arith.constant 0 : index
    %37 = vector.load %arg9[%c1_26, %c0_27, %c0_28] : memref<18x18x4xf32, #tpu.memory_space<vmem>>, vector<16x16x4xf32>
    %38 = vector.extract_strided_slice %14 {offsets = [1, 0, 0], sizes = [1, 1, 4], strides = [1, 1, 1]} : vector<3x3x4xf32> to vector<1x1x4xf32>
    %39 = vector.shape_cast %38 : vector<1x1x4xf32> to vector<4xf32>
    %40 = vector.shape_cast %39 : vector<4xf32> to vector<1x1x4xf32>
    %41 = vector.broadcast %40 : vector<1x1x4xf32> to vector<16x16x4xf32>
    %42 = arith.mulf %37, %41 : vector<16x16x4xf32>
    %43 = arith.addf %36, %42 : vector<16x16x4xf32>
    %c1_29 = arith.constant 1 : index
    %c1_30 = arith.constant 1 : index
    %c0_31 = arith.constant 0 : index
    %44 = vector.load %arg9[%c1_29, %c1_30, %c0_31] : memref<18x18x4xf32, #tpu.memory_space<vmem>>, vector<16x16x4xf32>
    %45 = vector.extract_strided_slice %14 {offsets = [1, 1, 0], sizes = [1, 1, 4], strides = [1, 1, 1]} : vector<3x3x4xf32> to vector<1x1x4xf32>
    %46 = vector.shape_cast %45 : vector<1x1x4xf32> to vector<4xf32>
    %47 = vector.shape_cast %46 : vector<4xf32> to vector<1x1x4xf32>
    %48 = vector.broadcast %47 : vector<1x1x4xf32> to vector<16x16x4xf32>
    %49 = arith.mulf %44, %48 : vector<16x16x4xf32>
    %50 = arith.addf %43, %49 : vector<16x16x4xf32>
    %c1_32 = arith.constant 1 : index
    %c2_33 = arith.constant 2 : index
    %c0_34 = arith.constant 0 : index
    %51 = vector.load %arg9[%c1_32, %c2_33, %c0_34] : memref<18x18x4xf32, #tpu.memory_space<vmem>>, vector<16x16x4xf32>
    %52 = vector.extract_strided_slice %14 {offsets = [1, 2, 0], sizes = [1, 1, 4], strides = [1, 1, 1]} : vector<3x3x4xf32> to vector<1x1x4xf32>
    %53 = vector.shape_cast %52 : vector<1x1x4xf32> to vector<4xf32>
    %54 = vector.shape_cast %53 : vector<4xf32> to vector<1x1x4xf32>
    %55 = vector.broadcast %54 : vector<1x1x4xf32> to vector<16x16x4xf32>
    %56 = arith.mulf %51, %55 : vector<16x16x4xf32>
    %57 = arith.addf %50, %56 : vector<16x16x4xf32>
    %c2_35 = arith.constant 2 : index
    %c0_36 = arith.constant 0 : index
    %c0_37 = arith.constant 0 : index
    %58 = vector.load %arg9[%c2_35, %c0_36, %c0_37] : memref<18x18x4xf32, #tpu.memory_space<vmem>>, vector<16x16x4xf32>
    %59 = vector.extract_strided_slice %14 {offsets = [2, 0, 0], sizes = [1, 1, 4], strides = [1, 1, 1]} : vector<3x3x4xf32> to vector<1x1x4xf32>
    %60 = vector.shape_cast %59 : vector<1x1x4xf32> to vector<4xf32>
    %61 = vector.shape_cast %60 : vector<4xf32> to vector<1x1x4xf32>
    %62 = vector.broadcast %61 : vector<1x1x4xf32> to vector<16x16x4xf32>
    %63 = arith.mulf %58, %62 : vector<16x16x4xf32>
    %64 = arith.addf %57, %63 : vector<16x16x4xf32>
    %c2_38 = arith.constant 2 : index
    %c1_39 = arith.constant 1 : index
    %c0_40 = arith.constant 0 : index
    %65 = vector.load %arg9[%c2_38, %c1_39, %c0_40] : memref<18x18x4xf32, #tpu.memory_space<vmem>>, vector<16x16x4xf32>
    %66 = vector.extract_strided_slice %14 {offsets = [2, 1, 0], sizes = [1, 1, 4], strides = [1, 1, 1]} : vector<3x3x4xf32> to vector<1x1x4xf32>
    %67 = vector.shape_cast %66 : vector<1x1x4xf32> to vector<4xf32>
    %68 = vector.shape_cast %67 : vector<4xf32> to vector<1x1x4xf32>
    %69 = vector.broadcast %68 : vector<1x1x4xf32> to vector<16x16x4xf32>
    %70 = arith.mulf %65, %69 : vector<16x16x4xf32>
    %71 = arith.addf %64, %70 : vector<16x16x4xf32>
    %c2_41 = arith.constant 2 : index
    %c2_42 = arith.constant 2 : index
    %c0_43 = arith.constant 0 : index
    %72 = vector.load %arg9[%c2_41, %c2_42, %c0_43] : memref<18x18x4xf32, #tpu.memory_space<vmem>>, vector<16x16x4xf32>
    %73 = vector.extract_strided_slice %14 {offsets = [2, 2, 0], sizes = [1, 1, 4], strides = [1, 1, 1]} : vector<3x3x4xf32> to vector<1x1x4xf32>
    %74 = vector.shape_cast %73 : vector<1x1x4xf32> to vector<4xf32>
    %75 = vector.shape_cast %74 : vector<4xf32> to vector<1x1x4xf32>
    %76 = vector.broadcast %75 : vector<1x1x4xf32> to vector<16x16x4xf32>
    %77 = arith.mulf %72, %76 : vector<16x16x4xf32>
    %78 = arith.addf %71, %77 : vector<16x16x4xf32>
    %c0_44 = arith.constant 0 : index
    %c0_45 = arith.constant 0 : index
    %79 = vector.load %arg5[%c0_44, %c0_45] : memref<1x4xf32, #tpu.memory_space<vmem>>, vector<1x4xf32>
    %80 = vector.shape_cast %79 : vector<1x4xf32> to vector<1x1x4xf32>
    %81 = vector.broadcast %80 : vector<1x1x4xf32> to vector<16x16x4xf32>
    %82 = arith.addf %78, %81 : vector<16x16x4xf32>
    %cst_46 = arith.constant 0.000000e+00 : f32
    %83 = vector.broadcast %cst_46 : f32 to vector<16x16x4xf32>
    %84 = arith.maximumf %82, %83 : vector<16x16x4xf32>
    %85 = vector.shape_cast %84 : vector<16x16x4xf32> to vector<256x4xf32>
    %c0_47 = arith.constant 0 : index
    %c0_48 = arith.constant 0 : index
    %86 = vector.load %arg6[%c0_47, %c0_48] : memref<4x16xf32, #tpu.memory_space<vmem>>, vector<4x16xf32>
    %cst_49 = arith.constant dense<0.000000e+00> : vector<256x16xf32>
    %87 = tpu.matmul %85, %86, %cst_49 {dimension_numbers = #tpu.dot_dimension_numbers<[1], [0], [0], [1], [0, 0, 1, 1], [], []>} : vector<256x4xf32>, vector<4x16xf32>, vector<256x16xf32> -> vector<256x16xf32>
    %c0_50 = arith.constant 0 : index
    %c0_51 = arith.constant 0 : index
    %88 = vector.load %arg7[%c0_50, %c0_51] : memref<1x16xf32, #tpu.memory_space<vmem>>, vector<1x16xf32>
    %89 = vector.broadcast %88 : vector<1x16xf32> to vector<256x16xf32>
    %90 = arith.addf %87, %89 : vector<256x16xf32>
    %91 = arith.addf %90, %2 : vector<256x16xf32>
    %cst_52 = arith.constant 0.000000e+00 : f32
    %92 = vector.broadcast %cst_52 : f32 to vector<256x16xf32>
    %93 = arith.maximumf %91, %92 : vector<256x16xf32>
    %94 = vector.shape_cast %93 : vector<256x16xf32> to vector<16x16x16xf32>
    %c0_53 = arith.constant 0 : index
    %c0_54 = arith.constant 0 : index
    %c0_55 = arith.constant 0 : index
    %c0_56 = arith.constant 0 : index
    %95 = vector.load %arg8[%c0_53, %c0_54, %c0_55, %c0_56] : memref<1x16x16x16xf32, #tpu.memory_space<vmem>>, vector<1x16x16x16xf32>
    %96 = vector.shape_cast %95 : vector<1x16x16x16xf32> to vector<16x16x16xf32>
    %97 = vector.shape_cast %94 : vector<16x16x16xf32> to vector<1x16x16x16xf32>
    tpu.vector_store %arg8[%c0_53, %c0_54, %c0_55, %c0_56], %97 {strides = array<i32>} : memref<1x16x16x16xf32, #tpu.memory_space<vmem>>, vector<1x16x16x16xf32>,
    return
  }
  func.func @transform_0(%arg0: i32) -> (i32, i32, i32, i32) {
    %c0_i32 = arith.constant 0 : i32
    %c0_i32_0 = arith.constant 0 : i32
    %c0_i32_1 = arith.constant 0 : i32
    %c0_i32_2 = arith.constant 0 : i32
    return %arg0, %c0_i32, %c0_i32_0, %c0_i32_1 : i32, i32, i32, i32
  }
  func.func @transform_1(%arg0: i32) -> (i32, i32) {
    %c0_i32 = arith.constant 0 : i32
    %c0_i32_0 = arith.constant 0 : i32
    %c0_i32_1 = arith.constant 0 : i32
    return %c0_i32, %c0_i32_0 : i32, i32
  }
  func.func @transform_2(%arg0: i32) -> (i32, i32) {
    %c0_i32 = arith.constant 0 : i32
    %c0_i32_0 = arith.constant 0 : i32
    %c0_i32_1 = arith.constant 0 : i32
    return %c0_i32, %c0_i32_0 : i32, i32
  }
  func.func @transform_3(%arg0: i32) -> (i32, i32, i32) {
    %c0_i32 = arith.constant 0 : i32
    %c0_i32_0 = arith.constant 0 : i32
    %c0_i32_1 = arith.constant 0 : i32
    %c0_i32_2 = arith.constant 0 : i32
    return %c0_i32, %c0_i32_0, %c0_i32_1 : i32, i32, i32
  }
  func.func @transform_4(%arg0: i32) -> (i32, i32) {
    %c0_i32 = arith.constant 0 : i32
    %c0_i32_0 = arith.constant 0 : i32
    %c0_i32_1 = arith.constant 0 : i32
    return %c0_i32, %c0_i32_0 : i32, i32
  }
  func.func @transform_5(%arg0: i32) -> (i32, i32) {
    %c0_i32 = arith.constant 0 : i32
    %c0_i32_0 = arith.constant 0 : i32
    %c0_i32_1 = arith.constant 0 : i32
    return %c0_i32, %c0_i32_0 : i32, i32
  }
  func.func @transform_6(%arg0: i32) -> (i32, i32) {
    %c0_i32 = arith.constant 0 : i32
    %c0_i32_0 = arith.constant 0 : i32
    %c0_i32_1 = arith.constant 0 : i32
    return %c0_i32, %c0_i32_0 : i32, i32
  }
  func.func @transform_7(%arg0: i32) -> (i32, i32, i32, i32) {
    %c0_i32 = arith.constant 0 : i32
    %c0_i32_0 = arith.constant 0 : i32
    %c0_i32_1 = arith.constant 0 : i32
    %c0_i32_2 = arith.constant 0 : i32
    return %arg0, %c0_i32, %c0_i32_0, %c0_i32_1 : i32, i32, i32, i32
  }
}

</mosaic_0001>

<llo_original>
// kernel: tpu_custom_call.1
$region0: #{tpu_custom_call.1}
  #allocation0 [shape = 'u32[]', space=smem, size = 0x4, offset = 0x4, fixed_abs, tag = 'smem constant byte address 0x4 - core index']
  #allocation1 [shape = 'u32[72,128]{1,0:T(1,128)}', space=vmem, size = 0x9000, scoped, tag = 'internal scratch']
  #allocation2 [shape = 'f32[18,18,4]{2,1,0:T(8,128)}', space=vmem, size = 0x36000, scoped, tag = 'scratch operand']
  %s0 = inlined_call_operand.hbm [shape: f32[2,16,16,16], index: 0, kind: input, shape index: {}]
  %s1 = inlined_call_operand.vmem [shape: f32[16,4], index: 1, kind: input, shape index: {}]
  %s2 = inlined_call_operand.vmem [shape: f32[1,4], index: 2, kind: input, shape index: {}]
  %s3 = inlined_call_operand.vmem [shape: f32[3,3,4], index: 3, kind: input, shape index: {}]
  %s4 = inlined_call_operand.vmem [shape: f32[1,4], index: 4, kind: input, shape index: {}]
  %s5 = inlined_call_operand.vmem [shape: f32[4,16], index: 5, kind: input, shape index: {}]
  %s6 = inlined_call_operand.vmem [shape: f32[1,16], index: 6, kind: input, shape index: {}]
  %s7 = inlined_call_operand.hbm [shape: f32[2,16,16,16], index: 7, kind: output, shape index: {}]
  %s8 = sld [smem:[#allocation0]]
  $region65: #{tpu_custom_call.1} parent=0
    _
  %s10 = ssub.s32 1, %s8
  %s11 = scalar_select 0, %s10, %s8
  $region1: #{tpu_custom_call.1} parent=0
    #allocation3 [shape = 'u8[262144]{0}', space=vmem, size = 0x40000, scoped, tag = 'input window, operand 0']
    #allocation4 [shape = 's32[2]{0}', space=sflag, size = 0x8, scoped, tag = 'scoped memory for tpu_custom_call.1']
    #allocation5 [shape = 's32[2]{0}', space=sflag, size = 0x8, scoped, tag = 'scoped memory for tpu_custom_call.1']
    #allocation6 [shape = 'u8[262144]{0}', space=vmem, size = 0x40000, scoped, tag = 'output window, operand 0']
    %12 = vsyncpa [#allocation4], 0
    %s13 = scalar_lea.sflag [#allocation4], 1
    %14 = vsyncpa %s13, 0
    %15 = vsyncpa [#allocation5], 0
    %s16 = scalar_lea.sflag [#allocation5], 1
    %17 = vsyncpa %s16, 0
    loop: start=0, step=1, limit=4
    $region2: #{tpu_custom_call.1} parent=1 // loop_pre_header
      _
    $region3: #{tpu_custom_call.1} parent=1 // loop_header
      %s19 = sphi 0, %s23
      %p20 = scmp.ge.s32.totalorder %s19, 4
      %s29 = sphi 0, %s31
      %s32 = sphi 0, %s29
      %s33 = sphi 0, %s32
      %s49 = sphi 0, %s33
      %s53 = sphi 0, %s53
      %s55 = sphi 0, %s53
      %s56 = sphi 0, %s55
      %s70 = sphi 0, %s56
      %s74 = sphi 0, %s74
      %s76 = sphi 0, %s74
      %s77 = sphi 0, %s76
      %s91 = sphi 0, %s77
      %s95 = sphi 0, %s95
      %s97 = sphi 0, %s95
      %s98 = sphi 0, %s97
      %s112 = sphi 0, %s98
      %s116 = sphi 0, %s116
      %s118 = sphi 0, %s116
      %s119 = sphi 0, %s118
      %s133 = sphi 0, %s119
      %s137 = sphi 0, %s137
      %s139 = sphi 0, %s137
      %s140 = sphi 0, %s139
      %s154 = sphi 0, %s140
      %s158 = sphi 0, %s158
      %s160 = sphi 0, %s158
      %s161 = sphi 0, %s160
      %s175 = sphi 0, %s161
      %s181 = sphi 0, %s183
      %s184 = sphi 0, %s181
      %s185 = sphi 0, %s184
      %s201 = sphi 0, %s185
    $region4: #{tpu_custom_call.1} parent=1 // loop_header_branch
      %22 = sbr.rel (%p20) target = $region8
    $region5: #{tpu_custom_call.1} parent=1 // loop_body
      %s24 = ssub.s32 %s19, 1
      %s25 = ssub.s32 %s19, 2
      %s26 = sadd.s32 %s19, 1
      %s27 = ssub.s32 %s19, %s26
      %p28 = scmp.eq.s32.totalorder %s27, 0
      %s30 = sadd.s32 %s29, 1
      %s31 = scalar_select %p28, %s29, %s30
      %p34 = pneg %p28
      %p35 = scmp.eq.s32.totalorder %s19, 1
      %p36 = por %p34, %p35
      %p37 = scmp.ne.s32.totalorder %s29, %s32
      %p38 = scmp.eq.s32.totalorder %s19, 0
      %p39 = por %p37, %p38
      %p40 = scmp.ne.s32.totalorder %s29, %s32
      %p41 = scmp.eq.s32.totalorder %s24, 1
      %p42 = por %p40, %p41
      %p43 = scmp.ne.s32.totalorder %s32, %s33
      %p44 = scmp.eq.s32.totalorder %s24, 0
      %p45 = por %p43, %p44
      %p46 = scmp.ne.s32.totalorder %s32, %s33
      %p47 = scmp.eq.s32.totalorder %s25, 1
      %p48 = por %p46, %p47
      %p50 = scmp.ne.s32.totalorder %s33, %s49
      %p51 = scmp.eq.s32.totalorder %s25, 0
      %p52 = por %p50, %p51
      %s54 = sadd.s32 %s53, 1
      %p57 = scmp.eq.s32.totalorder %s19, 1
      %p58 = scmp.ne.s32.totalorder %s53, %s55
      %p59 = scmp.eq.s32.totalorder %s19, 0
      %p60 = por %p58, %p59
      %p61 = scmp.ne.s32.totalorder %s53, %s55
      %p62 = scmp.eq.s32.totalorder %s24, 1
      %p63 = por %p61, %p62
      %p64 = scmp.ne.s32.totalorder %s55, %s56
      %p65 = scmp.eq.s32.totalorder %s24, 0
      %p66 = por %p64, %p65
      %p67 = scmp.ne.s32.totalorder %s55, %s56
      %p68 = scmp.eq.s32.totalorder %s25, 1
      %p69 = por %p67, %p68
      %p71 = scmp.ne.s32.totalorder %s56, %s70
      %p72 = scmp.eq.s32.totalorder %s25, 0
      %p73 = por %p71, %p72
      %s75 = sadd.s32 %s74, 1
      %p78 = scmp.eq.s32.totalorder %s19, 1
      %p79 = scmp.ne.s32.totalorder %s74, %s76
      %p80 = scmp.eq.s32.totalorder %s19, 0
      %p81 = por %p79, %p80
      %p82 = scmp.ne.s32.totalorder %s74, %s76
      %p83 = scmp.eq.s32.totalorder %s24, 1
      %p84 = por %p82, %p83
      %p85 = scmp.ne.s32.totalorder %s76, %s77
      %p86 = scmp.eq.s32.totalorder %s24, 0
      %p87 = por %p85, %p86
      %p88 = scmp.ne.s32.totalorder %s76, %s77
      %p89 = scmp.eq.s32.totalorder %s25, 1
      %p90 = por %p88, %p89
      %p92 = scmp.ne.s32.totalorder %s77, %s91
      %p93 = scmp.eq.s32.totalorder %s25, 0
      %p94 = por %p92, %p93
      %s96 = sadd.s32 %s95, 1
      %p99 = scmp.eq.s32.totalorder %s19, 1
      %p100 = scmp.ne.s32.totalorder %s95, %s97
      %p101 = scmp.eq.s32.totalorder %s19, 0
      %p102 = por %p100, %p101
      %p103 = scmp.ne.s32.totalorder %s95, %s97
      %p104 = scmp.eq.s32.totalorder %s24, 1
      %p105 = por %p103, %p104
      %p106 = scmp.ne.s32.totalorder %s97, %s98
      %p107 = scmp.eq.s32.totalorder %s24, 0
      %p108 = por %p106, %p107
      %p109 = scmp.ne.s32.totalorder %s97, %s98
      %p110 = scmp.eq.s32.totalorder %s25, 1
      %p111 = por %p109, %p110
      %p113 = scmp.ne.s32.totalorder %s98, %s112
      %p114 = scmp.eq.s32.totalorder %s25, 0
      %p115 = por %p113, %p114
      %s117 = sadd.s32 %s116, 1
      %p120 = scmp.eq.s32.totalorder %s19, 1
      %p121 = scmp.ne.s32.totalorder %s116, %s118
      %p122 = scmp.eq.s32.totalorder %s19, 0
      %p123 = por %p121, %p122
      %p124 = scmp.ne.s32.totalorder %s116, %s118
      %p125 = scmp.eq.s32.totalorder %s24, 1
      %p126 = por %p124, %p125
      %p127 = scmp.ne.s32.totalorder %s118, %s119
      %p128 = scmp.eq.s32.totalorder %s24, 0
      %p129 = por %p127, %p128
      %p130 = scmp.ne.s32.totalorder %s118, %s119
      %p131 = scmp.eq.s32.totalorder %s25, 1
      %p132 = por %p130, %p131
      %p134 = scmp.ne.s32.totalorder %s119, %s133
      %p135 = scmp.eq.s32.totalorder %s25, 0
      %p136 = por %p134, %p135
      %s138 = sadd.s32 %s137, 1
      %p141 = scmp.eq.s32.totalorder %s19, 1
      %p142 = scmp.ne.s32.totalorder %s137, %s139
      %p143 = scmp.eq.s32.totalorder %s19, 0
      %p144 = por %p142, %p143
      %p145 = scmp.ne.s32.totalorder %s137, %s139
      %p146 = scmp.eq.s32.totalorder %s24, 1
      %p147 = por %p145, %p146
      %p148 = scmp.ne.s32.totalorder %s139, %s140
      %p149 = scmp.eq.s32.totalorder %s24, 0
      %p150 = por %p148, %p149
      %p151 = scmp.ne.s32.totalorder %s139, %s140
      %p152 = scmp.eq.s32.totalorder %s25, 1
      %p153 = por %p151, %p152
      %p155 = scmp.ne.s32.totalorder %s140, %s154
      %p156 = scmp.eq.s32.totalorder %s25, 0
      %p157 = por %p155, %p156
      %s159 = sadd.s32 %s158, 1
      %p162 = scmp.eq.s32.totalorder %s19, 1
      %p163 = scmp.ne.s32.totalorder %s158, %s160
      %p164 = scmp.eq.s32.totalorder %s19, 0
      %p165 = por %p163, %p164
      %p166 = scmp.ne.s32.totalorder %s158, %s160
      %p167 = scmp.eq.s32.totalorder %s24, 1
      %p168 = por %p166, %p167
      %p169 = scmp.ne.s32.totalorder %s160, %s161
      %p170 = scmp.eq.s32.totalorder %s24, 0
      %p171 = por %p169, %p170
      %p172 = scmp.ne.s32.totalorder %s160, %s161
      %p173 = scmp.eq.s32.totalorder %s25, 1
      %p174 = por %p172, %p173
      %p176 = scmp.ne.s32.totalorder %s161, %s175
      %p177 = scmp.eq.s32.totalorder %s25, 0
      %p178 = por %p176, %p177
      %s179 = ssub.s32 %s19, %s26
      %p180 = scmp.eq.s32.totalorder %s179, 0
      %s182 = sadd.s32 %s181, 1
      %s183 = scalar_select %p180, %s181, %s182
      %p186 = pneg %p180
      %p187 = scmp.eq.s32.totalorder %s19, 1
      %p188 = por %p186, %p187
      %p189 = scmp.ne.s32.totalorder %s181, %s184
      %p190 = scmp.eq.s32.totalorder %s19, 0
      %p191 = por %p189, %p190
      %p192 = scmp.ne.s32.totalorder %s181, %s184
      %p193 = scmp.eq.s32.totalorder %s24, 1
      %p194 = por %p192, %p193
      %p195 = scmp.ne.s32.totalorder %s184, %s185
      %p196 = scmp.eq.s32.totalorder %s24, 0
      %p197 = por %p195, %p196
      %p198 = scmp.ne.s32.totalorder %s184, %s185
      %p199 = scmp.eq.s32.totalorder %s25, 1
      %p200 = por %p198, %p199
      %p202 = scmp.ne.s32.totalorder %s185, %s201
      %p203 = scmp.eq.s32.totalorder %s25, 0
      %p204 = por %p202, %p203
      %p205 = scmp.le.s32.totalorder 1, %s19
      %p206 = scmp.lt.s32.totalorder %s19, 3
      %p207 = pnand %p205, %p206
      %p208 = pneg %p207
      // Predicated region
      $region9: #{tpu_custom_call.1} parent=5 // pred_check
        _
      $region10: #{tpu_custom_call.1} parent=5 // pred_check_branch
        %210 = sbr.rel (%p207) target = $region12
      $region11: #{tpu_custom_call.1} parent=5 // pred_region
        %s211 = ssub.s32 %s19, 1
        // Predicated region
        $region13: #{tpu_custom_call.1} parent=11 // pred_check
          %p212 = pneg %p66
        $region14: #{tpu_custom_call.1} parent=11 // pred_check_branch
          %214 = sbr.rel (%p212) target = $region16
        $region15: #{tpu_custom_call.1} parent=11 // pred_region
          _
        $region16: #{tpu_custom_call.1} parent=11 // pred_fallthru
          _
        // Predicated region
        $region17: #{tpu_custom_call.1} parent=11 // pred_check
          %p215 = pneg %p87
        $region18: #{tpu_custom_call.1} parent=11 // pred_check_branch
          %217 = sbr.rel (%p215) target = $region20
        $region19: #{tpu_custom_call.1} parent=11 // pred_region
          _
        $region20: #{tpu_custom_call.1} parent=11 // pred_fallthru
          _
        // Predicated region
        $region21: #{tpu_custom_call.1} parent=11 // pred_check
          %p218 = pneg %p108
        $region22: #{tpu_custom_call.1} parent=11 // pred_check_branch
          %220 = sbr.rel (%p218) target = $region24
        $region23: #{tpu_custom_call.1} parent=11 // pred_region
          _
        $region24: #{tpu_custom_call.1} parent=11 // pred_fallthru
          _
        // Predicated region
        $region25: #{tpu_custom_call.1} parent=11 // pred_check
          %p221 = pneg %p129
        $region26: #{tpu_custom_call.1} parent=11 // pred_check_branch
          %223 = sbr.rel (%p221) target = $region28
        $region27: #{tpu_custom_call.1} parent=11 // pred_region
          _
        $region28: #{tpu_custom_call.1} parent=11 // pred_fallthru
          _
        // Predicated region
        $region29: #{tpu_custom_call.1} parent=11 // pred_check
          %p224 = pneg %p150
        $region30: #{tpu_custom_call.1} parent=11 // pred_check_branch
          %226 = sbr.rel (%p224) target = $region32
        $region31: #{tpu_custom_call.1} parent=11 // pred_region
          _
        $region32: #{tpu_custom_call.1} parent=11 // pred_fallthru
          _
        // Predicated region
        $region33: #{tpu_custom_call.1} parent=11 // pred_check
          %p227 = pneg %p171
        $region34: #{tpu_custom_call.1} parent=11 // pred_check_branch
          %229 = sbr.rel (%p227) target = $region36
        $region35: #{tpu_custom_call.1} parent=11 // pred_region
          _
        $region36: #{tpu_custom_call.1} parent=11 // pred_fallthru
          _
      $region12: #{tpu_custom_call.1} parent=5 // pred_fallthru
        _
      %p230 = scmp.lt.s32.totalorder %s19, 2
      // Predicated region
      $region37: #{tpu_custom_call.1} parent=5 // pred_check
        %p231 = pneg %p230
      $region38: #{tpu_custom_call.1} parent=5 // pred_check_branch
        %233 = sbr.rel (%p231) target = $region40
      $region39: #{tpu_custom_call.1} parent=5 // pred_region
        // Predicated region
        $region41: #{tpu_custom_call.1} parent=39 // pred_check
          %p234 = pneg %p39
        $region42: #{tpu_custom_call.1} parent=39 // pred_check_branch
          %236 = sbr.rel (%p234) target = $region44
        $region43: #{tpu_custom_call.1} parent=39 // pred_region
          %s237 = sand.u32 %s29, 1
          %s238 = scalar_lea.sflag [#allocation4], %s237
          %s239 = sand.u32 %s29, 1
          %s240 = smul.addr %s239, 256
          %s241 = scalar_lea.vmem [#allocation3], %s240
          %243 = vsyncadd %s238, 0
          %s244 = smul.addr %s19, 32
          %s245 = smul.addr %s244, 8
          %s246 = scalar_lea.hbm %s0, %s245
          %s247 = sshll.u32 %s246, 4
          %s248 = int_to_ptr.hbm [resolvable:$true] %s247
          %s249 = sshll.u32 %s241, 4
          %s250 = int_to_ptr.vmem [resolvable:$true] %s249
          %255 = dma.hbm_to_vmem [thread:$0]  %s248, 4096, %s250, %s238, 128, 128, 8
        $region44: #{tpu_custom_call.1} parent=39 // pred_fallthru
          _
      $region40: #{tpu_custom_call.1} parent=5 // pred_fallthru
        _
      %p256 = scmp.le.s32.totalorder 1, %s19
      %p257 = scmp.lt.s32.totalorder %s19, 3
      %p258 = pnand %p256, %p257
      %p259 = pneg %p258
      // Predicated region
      $region45: #{tpu_custom_call.1} parent=5 // pred_check
        _
      $region46: #{tpu_custom_call.1} parent=5 // pred_check_branch
        %261 = sbr.rel (%p258) target = $region48
      $region47: #{tpu_custom_call.1} parent=5 // pred_region
        %s262 = ssub.s32 %s19, 1
        %s263 = sand.u32 %s32, 1
        %s264 = scalar_lea.sflag [#allocation4], %s263
        %s265 = sand.u32 %s32, 1
        %s266 = smul.addr %s265, 256
        %s267 = scalar_lea.vmem [#allocation3], %s266
        // Predicated region
        $region49: #{tpu_custom_call.1} parent=47 // pred_check
          %p268 = pneg %p45
        $region50: #{tpu_custom_call.1} parent=47 // pred_check_branch
          %270 = sbr.rel (%p268) target = $region52
        $region51: #{tpu_custom_call.1} parent=47 // pred_region
          %272 = dma.done %s264, 4096
        $region52: #{tpu_custom_call.1} parent=47 // pred_fallthru
          _
        %s273 = sand.u32 %s32, 1
        %s274 = scalar_lea.sflag [#allocation4], %s273
        %s275 = sand.u32 %s32, 1
        %s276 = smul.addr %s275, 256
        %s277 = scalar_lea.vmem [#allocation3], %s276
        %p278 = pneg %p45
        %p279 = pneg %p42
        %p280 = pneg %p66
        %p281 = pneg %p63
        %p282 = pneg %p87
        %p283 = pneg %p84
        %p284 = pneg %p108
        %p285 = pneg %p105
        %p286 = pneg %p129
        %p287 = pneg %p126
        %p288 = pneg %p150
        %p289 = pneg %p147
        %p290 = pneg %p171
        %p291 = pneg %p168
        %p292 = pneg %p197
        %p293 = pneg %p194
        %s294 = sand.u32 %s184, 1
        %s295 = scalar_lea.sflag [#allocation5], %s294
        %s296 = sand.u32 %s184, 1
        %s297 = smul.addr %s296, 256
        %s298 = scalar_lea.vmem [#allocation6], %s297
        %v299 = vld [vmem:[%s267] sm:$0xff]
        %v300 = vld [vmem:[%s267 + $0x8] sm:$0xff]
        %v301 = vld [vmem:[%s267 + $0x10] sm:$0xff]
        %v302 = vld [vmem:[%s267 + $0x18] sm:$0xff]
        %v303 = vld [vmem:[%s267 + $0x20] sm:$0xff]
        %v304 = vld [vmem:[%s267 + $0x28] sm:$0xff]
        %v305 = vld [vmem:[%s267 + $0x30] sm:$0xff]
        %v306 = vld [vmem:[%s267 + $0x38] sm:$0xff]
        %v307 = vld [vmem:[%s267 + $0x40] sm:$0xff]
        %v308 = vld [vmem:[%s267 + $0x48] sm:$0xff]
        %v309 = vld [vmem:[%s267 + $0x50] sm:$0xff]
        %v310 = vld [vmem:[%s267 + $0x58] sm:$0xff]
        %v311 = vld [vmem:[%s267 + $0x60] sm:$0xff]
        %v312 = vld [vmem:[%s267 + $0x68] sm:$0xff]
        %v313 = vld [vmem:[%s267 + $0x70] sm:$0xff]
        %v314 = vld [vmem:[%s267 + $0x78] sm:$0xff]
        %v315 = vld [vmem:[%s267 + $0x80] sm:$0xff]
        %v316 = vld [vmem:[%s267 + $0x88] sm:$0xff]
        %v317 = vld [vmem:[%s267 + $0x90] sm:$0xff]
        %v318 = vld [vmem:[%s267 + $0x98] sm:$0xff]
        %v319 = vld [vmem:[%s267 + $0xa0] sm:$0xff]
        %v320 = vld [vmem:[%s267 + $0xa8] sm:$0xff]
        %v321 = vld [vmem:[%s267 + $0xb0] sm:$0xff]
        %v322 = vld [vmem:[%s267 + $0xb8] sm:$0xff]
        %v323 = vld [vmem:[%s267 + $0xc0] sm:$0xff]
        %v324 = vld [vmem:[%s267 + $0xc8] sm:$0xff]
        %v325 = vld [vmem:[%s267 + $0xd0] sm:$0xff]
        %v326 = vld [vmem:[%s267 + $0xd8] sm:$0xff]
        %v327 = vld [vmem:[%s267 + $0xe0] sm:$0xff]
        %v328 = vld [vmem:[%s267 + $0xe8] sm:$0xff]
        %v329 = vld [vmem:[%s267 + $0xf0] sm:$0xff]
        %v330 = vld [vmem:[%s267 + $0xf8] sm:$0xff]
        %v331 = vld [vmem:[%s1] sm:$0xff]
        %v332 = vld [vmem:[%s1 + $0x8] sm:$0xff]
        %v333 = vld [vmem:[%s2] sm:$0x1]
        %v335 = vperm.slane %v333, 0
        %vm337 = vcmask 130048
        %v339 = vsel %vm337, %v299, 0
        %v342 = vsel %vm337, %v300, 0
        %v345 = vsel %vm337, %v301, 0
        %v348 = vsel %vm337, %v302, 0
        %v351 = vsel %vm337, %v303, 0
        %v354 = vsel %vm337, %v304, 0
        %v357 = vsel %vm337, %v305, 0
        %v360 = vsel %vm337, %v306, 0
        %v363 = vsel %vm337, %v307, 0
        %v366 = vsel %vm337, %v308, 0
        %v369 = vsel %vm337, %v309, 0
        %v372 = vsel %vm337, %v310, 0
        %v375 = vsel %vm337, %v311, 0
        %v378 = vsel %vm337, %v312, 0
        %v381 = vsel %vm337, %v313, 0
        %v384 = vsel %vm337, %v314, 0
        %v387 = vsel %vm337, %v315, 0
        %v390 = vsel %vm337, %v316, 0
        %v393 = vsel %vm337, %v317, 0
        %v396 = vsel %vm337, %v318, 0
        %v399 = vsel %vm337, %v319, 0
        %v402 = vsel %vm337, %v320, 0
        %v405 = vsel %vm337, %v321, 0
        %v408 = vsel %vm337, %v322, 0
        %v411 = vsel %vm337, %v323, 0
        %v414 = vsel %vm337, %v324, 0
        %v417 = vsel %vm337, %v325, 0
        %v420 = vsel %vm337, %v326, 0
        %v423 = vsel %vm337, %v327, 0
        %v426 = vsel %vm337, %v328, 0
        %v429 = vsel %vm337, %v329, 0
        %v432 = vsel %vm337, %v330, 0
        %434 = vmatpush.msra.mxu0 0.0
        %435 = vmatpush.msra.mxu0 0.0
        %436 = vmatpush.msra.mxu0 0.0
        %437 = vmatpush.msra.mxu0 0.0
        %438 = vmatpush.msra.mxu0 0.0
        %439 = vmatpush.msra.mxu0 0.0
        %440 = vmatpush.msra.mxu0 0.0
        %441 = vmatpush.msra.mxu0 0.0
        %442 = vmatpush.msra.mxu0 0.0
        %443 = vmatpush.msra.mxu0 0.0
        %444 = vmatpush.msra.mxu0 0.0
        %445 = vmatpush.msra.mxu0 0.0
        %446 = vmatpush.msra.mxu0 0.0
        %447 = vmatpush.msra.mxu0 0.0
        %448 = vmatpush.msra.mxu0 %v332
        %449 = vmatpush.msra.mxu0 %v331
        %450 = vmatmul.f32.gmra.mxu0 %v339
        %v451 = vpop.f32.mrf.mxu0
        %v452 = vadd.f32 %v335, %v451
        %453 = vmatmul.f32.gmra.mxu0 %v342
        %v454 = vpop.f32.mrf.mxu0
        %v455 = vadd.f32 %v335, %v454
        %456 = vmatmul.f32.gmra.mxu0 %v345
        %v457 = vpop.f32.mrf.mxu0
        %v458 = vadd.f32 %v335, %v457
        %459 = vmatmul.f32.gmra.mxu0 %v348
        %v460 = vpop.f32.mrf.mxu0
        %v461 = vadd.f32 %v335, %v460
        %462 = vmatmul.f32.gmra.mxu0 %v351
        %v463 = vpop.f32.mrf.mxu0
        %v464 = vadd.f32 %v335, %v463
        %465 = vmatmul.f32.gmra.mxu0 %v354
        %v466 = vpop.f32.mrf.mxu0
        %v467 = vadd.f32 %v335, %v466
        %468 = vmatmul.f32.gmra.mxu0 %v357
        %v469 = vpop.f32.mrf.mxu0
        %v470 = vadd.f32 %v335, %v469
        %471 = vmatmul.f32.gmra.mxu0 %v360
        %v472 = vpop.f32.mrf.mxu0
        %v473 = vadd.f32 %v335, %v472
        %474 = vmatmul.f32.gmra.mxu0 %v363
        %v475 = vpop.f32.mrf.mxu0
        %v476 = vadd.f32 %v335, %v475
        %477 = vmatmul.f32.gmra.mxu0 %v366
        %v478 = vpop.f32.mrf.mxu0
        %v479 = vadd.f32 %v335, %v478
        %480 = vmatmul.f32.gmra.mxu0 %v369
        %v481 = vpop.f32.mrf.mxu0
        %v482 = vadd.f32 %v335, %v481
        %483 = vmatmul.f32.gmra.mxu0 %v372
        %v484 = vpop.f32.mrf.mxu0
        %v485 = vadd.f32 %v335, %v484
        %486 = vmatmul.f32.gmra.mxu0 %v375
        %v487 = vpop.f32.mrf.mxu0
        %v488 = vadd.f32 %v335, %v487
        %489 = vmatmul.f32.gmra.mxu0 %v378
        %v490 = vpop.f32.mrf.mxu0
        %v491 = vadd.f32 %v335, %v490
        %492 = vmatmul.f32.gmra.mxu0 %v381
        %v493 = vpop.f32.mrf.mxu0
        %v494 = vadd.f32 %v335, %v493
        %495 = vmatmul.f32.gmra.mxu0 %v384
        %v496 = vpop.f32.mrf.mxu0
        %v497 = vadd.f32 %v335, %v496
        %498 = vmatmul.f32.gmra.mxu0 %v387
        %v499 = vpop.f32.mrf.mxu0
        %v500 = vadd.f32 %v335, %v499
        %501 = vmatmul.f32.gmra.mxu0 %v390
        %v502 = vpop.f32.mrf.mxu0
        %v503 = vadd.f32 %v335, %v502
        %504 = vmatmul.f32.gmra.mxu0 %v393
        %v505 = vpop.f32.mrf.mxu0
        %v506 = vadd.f32 %v335, %v505
        %507 = vmatmul.f32.gmra.mxu0 %v396
        %v508 = vpop.f32.mrf.mxu0
        %v509 = vadd.f32 %v335, %v508
        %510 = vmatmul.f32.gmra.mxu0 %v399
        %v511 = vpop.f32.mrf.mxu0
        %v512 = vadd.f32 %v335, %v511
        %513 = vmatmul.f32.gmra.mxu0 %v402
        %v514 = vpop.f32.mrf.mxu0
        %v515 = vadd.f32 %v335, %v514
        %516 = vmatmul.f32.gmra.mxu0 %v405
        %v517 = vpop.f32.mrf.mxu0
        %v518 = vadd.f32 %v335, %v517
        %519 = vmatmul.f32.gmra.mxu0 %v408
        %v520 = vpop.f32.mrf.mxu0
        %v521 = vadd.f32 %v335, %v520
        %522 = vmatmul.f32.gmra.mxu0 %v411
        %v523 = vpop.f32.mrf.mxu0
        %v524 = vadd.f32 %v335, %v523
        %525 = vmatmul.f32.gmra.mxu0 %v414
        %v526 = vpop.f32.mrf.mxu0
        %v527 = vadd.f32 %v335, %v526
        %528 = vmatmul.f32.gmra.mxu0 %v417
        %v529 = vpop.f32.mrf.mxu0
        %v530 = vadd.f32 %v335, %v529
        %531 = vmatmul.f32.gmra.mxu0 %v420
        %v532 = vpop.f32.mrf.mxu0
        %v533 = vadd.f32 %v335, %v532
        %534 = vmatmul.f32.gmra.mxu0 %v423
        %v535 = vpop.f32.mrf.mxu0
        %v536 = vadd.f32 %v335, %v535
        %537 = vmatmul.f32.gmra.mxu0 %v426
        %v538 = vpop.f32.mrf.mxu0
        %v539 = vadd.f32 %v335, %v538
        %540 = vmatmul.f32.gmra.mxu0 %v429
        %v541 = vpop.f32.mrf.mxu0
        %v542 = vadd.f32 %v335, %v541
        %543 = vmatmul.f32.gmra.mxu0 %v432
        %v544 = vpop.f32.mrf.mxu0
        %v545 = vadd.f32 %v335, %v544
        %546 = vdwg.mxu0
        %v547 = vmax.f32 %v452, 0.0
        %v548 = vmax.f32 %v455, 0.0
        %v549 = vmax.f32 %v458, 0.0
        %v550 = vmax.f32 %v461, 0.0
        %v551 = vmax.f32 %v464, 0.0
        %v552 = vmax.f32 %v467, 0.0
        %v553 = vmax.f32 %v470, 0.0
        %v554 = vmax.f32 %v473, 0.0
        %v555 = vmax.f32 %v476, 0.0
        %v556 = vmax.f32 %v479, 0.0
        %v557 = vmax.f32 %v482, 0.0
        %v558 = vmax.f32 %v485, 0.0
        %v559 = vmax.f32 %v488, 0.0
        %v560 = vmax.f32 %v491, 0.0
        %v561 = vmax.f32 %v494, 0.0
        %v562 = vmax.f32 %v497, 0.0
        %v563 = vmax.f32 %v500, 0.0
        %v564 = vmax.f32 %v503, 0.0
        %v565 = vmax.f32 %v506, 0.0
        %v566 = vmax.f32 %v509, 0.0
        %v567 = vmax.f32 %v512, 0.0
        %v568 = vmax.f32 %v515, 0.0
        %v569 = vmax.f32 %v518, 0.0
        %v570 = vmax.f32 %v521, 0.0
        %v571 = vmax.f32 %v524, 0.0
        %v572 = vmax.f32 %v527, 0.0
        %v573 = vmax.f32 %v530, 0.0
        %v574 = vmax.f32 %v533, 0.0
        %v575 = vmax.f32 %v536, 0.0
        %v576 = vmax.f32 %v539, 0.0
        %v577 = vmax.f32 %v542, 0.0
        %v578 = vmax.f32 %v545, 0.0
        %vm579 = vcmask 31744
        %580 = vst.msk [vmem:[#allocation2] sm:$0xff] %vm579, 0.0
        %581 = vst.msk [vmem:[#allocation2 + $0x8] sm:$0xff] %vm579, 0.0
        %vm582 = vcmask 25600
        %583 = vst.msk [vmem:[#allocation2 + $0x10] sm:$0x3] %vm582, 0.0
        %584 = vst.msk [vmem:[#allocation2 + $0x18] sm:$0xff] %vm579, 0.0
        %585 = vst.msk [vmem:[#allocation2 + $0x20] sm:$0xff] %vm579, 0.0
        %586 = vst.msk [vmem:[#allocation2 + $0x28] sm:$0x3] %vm582, 0.0
        %587 = vst.msk [vmem:[#allocation2 + $0x30] sm:$0xff] %vm579, 0.0
        %588 = vst.msk [vmem:[#allocation2 + $0x38] sm:$0xff] %vm579, 0.0
        %589 = vst.msk [vmem:[#allocation2 + $0x40] sm:$0x3] %vm582, 0.0
        %590 = vst.msk [vmem:[#allocation2 + $0x48] sm:$0xff] %vm579, 0.0
        %591 = vst.msk [vmem:[#allocation2 + $0x50] sm:$0xff] %vm579, 0.0
        %592 = vst.msk [vmem:[#allocation2 + $0x58] sm:$0x3] %vm582, 0.0
        %593 = vst.msk [vmem:[#allocation2 + $0x60] sm:$0xff] %vm579, 0.0
        %594 = vst.msk [vmem:[#allocation2 + $0x68] sm:$0xff] %vm579, 0.0
        %595 = vst.msk [vmem:[#allocation2 + $0x70] sm:$0x3] %vm582, 0.0
        %596 = vst.msk [vmem:[#allocation2 + $0x78] sm:$0xff] %vm579, 0.0
        %597 = vst.msk [vmem:[#allocation2 + $0x80] sm:$0xff] %vm579, 0.0
        %598 = vst.msk [vmem:[#allocation2 + $0x88] sm:$0x3] %vm582, 0.0
        %599 = vst.msk [vmem:[#allocation2 + $0x90] sm:$0xff] %vm579, 0.0
        %600 = vst.msk [vmem:[#allocation2 + $0x98] sm:$0xff] %vm579, 0.0
        %601 = vst.msk [vmem:[#allocation2 + $0xa0] sm:$0x3] %vm582, 0.0
        %602 = vst.msk [vmem:[#allocation2 + $0xa8] sm:$0xff] %vm579, 0.0
        %603 = vst.msk [vmem:[#allocation2 + $0xb0] sm:$0xff] %vm579, 0.0
        %604 = vst.msk [vmem:[#allocation2 + $0xb8] sm:$0x3] %vm582, 0.0
        %605 = vst.msk [vmem:[#allocation2 + $0xc0] sm:$0xff] %vm579, 0.0
        %606 = vst.msk [vmem:[#allocation2 + $0xc8] sm:$0xff] %vm579, 0.0
        %607 = vst.msk [vmem:[#allocation2 + $0xd0] sm:$0x3] %vm582, 0.0
        %608 = vst.msk [vmem:[#allocation2 + $0xd8] sm:$0xff] %vm579, 0.0
        %609 = vst.msk [vmem:[#allocation2 + $0xe0] sm:$0xff] %vm579, 0.0
        %610 = vst.msk [vmem:[#allocation2 + $0xe8] sm:$0x3] %vm582, 0.0
        %611 = vst.msk [vmem:[#allocation2 + $0xf0] sm:$0xff] %vm579, 0.0
        %612 = vst.msk [vmem:[#allocation2 + $0xf8] sm:$0xff] %vm579, 0.0
        %613 = vst.msk [vmem:[#allocation2 + $0x100] sm:$0x3] %vm582, 0.0
        %614 = vst.msk [vmem:[#allocation2 + $0x108] sm:$0xff] %vm579, 0.0
        %615 = vst.msk [vmem:[#allocation2 + $0x110] sm:$0xff] %vm579, 0.0
        %616 = vst.msk [vmem:[#allocation2 + $0x118] sm:$0x3] %vm582, 0.0
        %617 = vst.msk [vmem:[#allocation2 + $0x120] sm:$0xff] %vm579, 0.0
        %618 = vst.msk [vmem:[#allocation2 + $0x128] sm:$0xff] %vm579, 0.0
        %619 = vst.msk [vmem:[#allocation2 + $0x130] sm:$0x3] %vm582, 0.0
        %620 = vst.msk [vmem:[#allocation2 + $0x138] sm:$0xff] %vm579, 0.0
        %621 = vst.msk [vmem:[#allocation2 + $0x140] sm:$0xff] %vm579, 0.0
        %622 = vst.msk [vmem:[#allocation2 + $0x148] sm:$0x3] %vm582, 0.0
        %623 = vst.msk [vmem:[#allocation2 + $0x150] sm:$0xff] %vm579, 0.0
        %624 = vst.msk [vmem:[#allocation2 + $0x158] sm:$0xff] %vm579, 0.0
        %625 = vst.msk [vmem:[#allocation2 + $0x160] sm:$0x3] %vm582, 0.0
        %626 = vst.msk [vmem:[#allocation2 + $0x168] sm:$0xff] %vm579, 0.0
        %627 = vst.msk [vmem:[#allocation2 + $0x170] sm:$0xff] %vm579, 0.0
        %628 = vst.msk [vmem:[#allocation2 + $0x178] sm:$0x3] %vm582, 0.0
        %629 = vst.msk [vmem:[#allocation2 + $0x180] sm:$0xff] %vm579, 0.0
        %630 = vst.msk [vmem:[#allocation2 + $0x188] sm:$0xff] %vm579, 0.0
        %631 = vst.msk [vmem:[#allocation2 + $0x190] sm:$0x3] %vm582, 0.0
        %632 = vst.msk [vmem:[#allocation2 + $0x198] sm:$0xff] %vm579, 0.0
        %633 = vst.msk [vmem:[#allocation2 + $0x1a0] sm:$0xff] %vm579, 0.0
        %634 = vst.msk [vmem:[#allocation2 + $0x1a8] sm:$0x3] %vm582, 0.0
        %s635 = scalar_lea.vmem [#allocation2], 24
        %636 = vst.msk [vmem:[%s635 + $0x1] sm:$0xff] %vm579, %v547
        %637 = vst.msk [vmem:[%s635 + $0x9] sm:$0xff] %vm579, %v548
        %638 = vst.msk [vmem:[%s635 + $0x19] sm:$0xff] %vm579, %v549
        %639 = vst.msk [vmem:[%s635 + $0x21] sm:$0xff] %vm579, %v550
        %640 = vst.msk [vmem:[%s635 + $0x31] sm:$0xff] %vm579, %v551
        %641 = vst.msk [vmem:[%s635 + $0x39] sm:$0xff] %vm579, %v552
        %642 = vst.msk [vmem:[%s635 + $0x49] sm:$0xff] %vm579, %v553
        %643 = vst.msk [vmem:[%s635 + $0x51] sm:$0xff] %vm579, %v554
        %644 = vst.msk [vmem:[%s635 + $0x61] sm:$0xff] %vm579, %v555
        %645 = vst.msk [vmem:[%s635 + $0x69] sm:$0xff] %vm579, %v556
        %646 = vst.msk [vmem:[%s635 + $0x79] sm:$0xff] %vm579, %v557
        %647 = vst.msk [vmem:[%s635 + $0x81] sm:$0xff] %vm579, %v558
        %648 = vst.msk [vmem:[%s635 + $0x91] sm:$0xff] %vm579, %v559
        %649 = vst.msk [vmem:[%s635 + $0x99] sm:$0xff] %vm579, %v560
        %650 = vst.msk [vmem:[%s635 + $0xa9] sm:$0xff] %vm579, %v561
        %651 = vst.msk [vmem:[%s635 + $0xb1] sm:$0xff] %vm579, %v562
        %652 = vst.msk [vmem:[%s635 + $0xc1] sm:$0xff] %vm579, %v563
        %653 = vst.msk [vmem:[%s635 + $0xc9] sm:$0xff] %vm579, %v564
        %654 = vst.msk [vmem:[%s635 + $0xd9] sm:$0xff] %vm579, %v565
        %655 = vst.msk [vmem:[%s635 + $0xe1] sm:$0xff] %vm579, %v566
        %656 = vst.msk [vmem:[%s635 + $0xf1] sm:$0xff] %vm579, %v567
        %657 = vst.msk [vmem:[%s635 + $0xf9] sm:$0xff] %vm579, %v568
        %658 = vst.msk [vmem:[%s635 + $0x109] sm:$0xff] %vm579, %v569
        %659 = vst.msk [vmem:[%s635 + $0x111] sm:$0xff] %vm579, %v570
        %660 = vst.msk [vmem:[%s635 + $0x121] sm:$0xff] %vm579, %v571
        %661 = vst.msk [vmem:[%s635 + $0x129] sm:$0xff] %vm579, %v572
        %662 = vst.msk [vmem:[%s635 + $0x139] sm:$0xff] %vm579, %v573
        %663 = vst.msk [vmem:[%s635 + $0x141] sm:$0xff] %vm579, %v574
        %664 = vst.msk [vmem:[%s635 + $0x151] sm:$0xff] %vm579, %v575
        %665 = vst.msk [vmem:[%s635 + $0x159] sm:$0xff] %vm579, %v576
        %666 = vst.msk [vmem:[%s635 + $0x169] sm:$0xff] %vm579, %v577
        %667 = vst.msk [vmem:[%s635 + $0x171] sm:$0xff] %vm579, %v578
        %v668 = vld [vmem:[%s3] sm:$0x7]
        %v669 = vld [vmem:[%s3 + $0x4] sm:$0x7]
        %v670 = vld [vmem:[%s3 + $0x8] sm:$0x7]
        %v671 = vld [vmem:[#allocation2] sm:$0xff]
        %v672 = vld [vmem:[#allocation2 + $0x8] sm:$0xff]
        %v673 = vld [vmem:[#allocation2 + $0x18] sm:$0xff]
        %v674 = vld [vmem:[#allocation2 + $0x20] sm:$0xff]
        %v675 = vld [vmem:[#allocation2 + $0x30] sm:$0xff]
        %v676 = vld [vmem:[#allocation2 + $0x38] sm:$0xff]
        %v677 = vld [vmem:[#allocation2 + $0x48] sm:$0xff]
        %v678 = vld [vmem:[#allocation2 + $0x50] sm:$0xff]
        %v679 = vld [vmem:[#allocation2 + $0x60] sm:$0xff]
        %v680 = vld [vmem:[#allocation2 + $0x68] sm:$0xff]
        %v681 = vld [vmem:[#allocation2 + $0x78] sm:$0xff]
        %v682 = vld [vmem:[#allocation2 + $0x80] sm:$0xff]
        %v683 = vld [vmem:[#allocation2 + $0x90] sm:$0xff]
        %v684 = vld [vmem:[#allocation2 + $0x98] sm:$0xff]
        %v685 = vld [vmem:[#allocation2 + $0xa8] sm:$0xff]
        %v686 = vld [vmem:[#allocation2 + $0xb0] sm:$0xff]
        %v687 = vld [vmem:[#allocation2 + $0xc0] sm:$0xff]
        %v688 = vld [vmem:[#allocation2 + $0xc8] sm:$0xff]
        %v689 = vld [vmem:[#allocation2 + $0xd8] sm:$0xff]
        %v690 = vld [vmem:[#allocation2 + $0xe0] sm:$0xff]
        %v691 = vld [vmem:[#allocation2 + $0xf0] sm:$0xff]
        %v692 = vld [vmem:[#allocation2 + $0xf8] sm:$0xff]
        %v693 = vld [vmem:[#allocation2 + $0x108] sm:$0xff]
        %v694 = vld [vmem:[#allocation2 + $0x110] sm:$0xff]
        %v695 = vld [vmem:[#allocation2 + $0x120] sm:$0xff]
        %v696 = vld [vmem:[#allocation2 + $0x128] sm:$0xff]
        %v697 = vld [vmem:[#allocation2 + $0x138] sm:$0xff]
        %v698 = vld [vmem:[#allocation2 + $0x140] sm:$0xff]
        %v699 = vld [vmem:[#allocation2 + $0x150] sm:$0xff]
        %v700 = vld [vmem:[#allocation2 + $0x158] sm:$0xff]
        %v701 = vld [vmem:[#allocation2 + $0x168] sm:$0xff]
        %v702 = vld [vmem:[#allocation2 + $0x170] sm:$0xff]
        %v703 = vperm.slane %v668, 0
        %v704 = vmul.f32 %v671, %v703
        %v705 = vmul.f32 %v672, %v703
        %v706 = vmul.f32 %v673, %v703
        %v707 = vmul.f32 %v674, %v703
        %v708 = vmul.f32 %v675, %v703
        %v709 = vmul.f32 %v676, %v703
        %v710 = vmul.f32 %v677, %v703
        %v711 = vmul.f32 %v678, %v703
        %v712 = vmul.f32 %v679, %v703
        %v713 = vmul.f32 %v680, %v703
        %v714 = vmul.f32 %v681, %v703
        %v715 = vmul.f32 %v682, %v703
        %v716 = vmul.f32 %v683, %v703
        %v717 = vmul.f32 %v684, %v703
        %v718 = vmul.f32 %v685, %v703
        %v719 = vmul.f32 %v686, %v703
        %v720 = vmul.f32 %v687, %v703
        %v721 = vmul.f32 %v688, %v703
        %v722 = vmul.f32 %v689, %v703
        %v723 = vmul.f32 %v690, %v703
        %v724 = vmul.f32 %v691, %v703
        %v725 = vmul.f32 %v692, %v703
        %v726 = vmul.f32 %v693, %v703
        %v727 = vmul.f32 %v694, %v703
        %v728 = vmul.f32 %v695, %v703
        %v729 = vmul.f32 %v696, %v703
        %v730 = vmul.f32 %v697, %v703
        %v731 = vmul.f32 %v698, %v703
        %v732 = vmul.f32 %v699, %v703
        %v733 = vmul.f32 %v700, %v703
        %v734 = vmul.f32 %v701, %v703
        %v735 = vmul.f32 %v702, %v703
        %v736 = vadd.f32 %v704, 0.0
        %v737 = vadd.f32 %v705, 0.0
        %v738 = vadd.f32 %v706, 0.0
        %v739 = vadd.f32 %v707, 0.0
        %v740 = vadd.f32 %v708, 0.0
        %v741 = vadd.f32 %v709, 0.0
        %v742 = vadd.f32 %v710, 0.0
        %v743 = vadd.f32 %v711, 0.0
        %v744 = vadd.f32 %v712, 0.0
        %v745 = vadd.f32 %v713, 0.0
        %v746 = vadd.f32 %v714, 0.0
        %v747 = vadd.f32 %v715, 0.0
        %v748 = vadd.f32 %v716, 0.0
        %v749 = vadd.f32 %v717, 0.0
        %v750 = vadd.f32 %v718, 0.0
        %v751 = vadd.f32 %v719, 0.0
        %v752 = vadd.f32 %v720, 0.0
        %v753 = vadd.f32 %v721, 0.0
        %v754 = vadd.f32 %v722, 0.0
        %v755 = vadd.f32 %v723, 0.0
        %v756 = vadd.f32 %v724, 0.0
        %v757 = vadd.f32 %v725, 0.0
        %v758 = vadd.f32 %v726, 0.0
        %v759 = vadd.f32 %v727, 0.0
        %v760 = vadd.f32 %v728, 0.0
        %v761 = vadd.f32 %v729, 0.0
        %v762 = vadd.f32 %v730, 0.0
        %v763 = vadd.f32 %v731, 0.0
        %v764 = vadd.f32 %v732, 0.0
        %v765 = vadd.f32 %v733, 0.0
        %v766 = vadd.f32 %v734, 0.0
        %v767 = vadd.f32 %v735, 0.0
        %v768 = vld [vmem:[#allocation2 + $0x1] sm:$0xff]
        %v769 = vld [vmem:[#allocation2 + $0x9] sm:$0xff]
        %v770 = vld [vmem:[#allocation2 + $0x19] sm:$0xff]
        %v771 = vld [vmem:[#allocation2 + $0x21] sm:$0xff]
        %v772 = vld [vmem:[#allocation2 + $0x31] sm:$0xff]
        %v773 = vld [vmem:[#allocation2 + $0x39] sm:$0xff]
        %v774 = vld [vmem:[#allocation2 + $0x49] sm:$0xff]
        %v775 = vld [vmem:[#allocation2 + $0x51] sm:$0xff]
        %v776 = vld [vmem:[#allocation2 + $0x61] sm:$0xff]
        %v777 = vld [vmem:[#allocation2 + $0x69] sm:$0xff]
        %v778 = vld [vmem:[#allocation2 + $0x79] sm:$0xff]
        %v779 = vld [vmem:[#allocation2 + $0x81] sm:$0xff]
        %v780 = vld [vmem:[#allocation2 + $0x91] sm:$0xff]
        %v781 = vld [vmem:[#allocation2 + $0x99] sm:$0xff]
        %v782 = vld [vmem:[#allocation2 + $0xa9] sm:$0xff]
        %v783 = vld [vmem:[#allocation2 + $0xb1] sm:$0xff]
        %v784 = vld [vmem:[#allocation2 + $0xc1] sm:$0xff]
        %v785 = vld [vmem:[#allocation2 + $0xc9] sm:$0xff]
        %v786 = vld [vmem:[#allocation2 + $0xd9] sm:$0xff]
        %v787 = vld [vmem:[#allocation2 + $0xe1] sm:$0xff]
        %v788 = vld [vmem:[#allocation2 + $0xf1] sm:$0xff]
        %v789 = vld [vmem:[#allocation2 + $0xf9] sm:$0xff]
        %v790 = vld [vmem:[#allocation2 + $0x109] sm:$0xff]
        %v791 = vld [vmem:[#allocation2 + $0x111] sm:$0xff]
        %v792 = vld [vmem:[#allocation2 + $0x121] sm:$0xff]
        %v793 = vld [vmem:[#allocation2 + $0x129] sm:$0xff]
        %v794 = vld [vmem:[#allocation2 + $0x139] sm:$0xff]
        %v795 = vld [vmem:[#allocation2 + $0x141] sm:$0xff]
        %v796 = vld [vmem:[#allocation2 + $0x151] sm:$0xff]
        %v797 = vld [vmem:[#allocation2 + $0x159] sm:$0xff]
        %v798 = vld [vmem:[#allocation2 + $0x169] sm:$0xff]
        %v799 = vld [vmem:[#allocation2 + $0x171] sm:$0xff]
        %v800 = vperm.slane %v668, 1
        %v801 = vmul.f32 %v768, %v800
        %v802 = vmul.f32 %v769, %v800
        %v803 = vmul.f32 %v770, %v800
        %v804 = vmul.f32 %v771, %v800
        %v805 = vmul.f32 %v772, %v800
        %v806 = vmul.f32 %v773, %v800
        %v807 = vmul.f32 %v774, %v800
        %v808 = vmul.f32 %v775, %v800
        %v809 = vmul.f32 %v776, %v800
        %v810 = vmul.f32 %v777, %v800
        %v811 = vmul.f32 %v778, %v800
        %v812 = vmul.f32 %v779, %v800
        %v813 = vmul.f32 %v780, %v800
        %v814 = vmul.f32 %v781, %v800
        %v815 = vmul.f32 %v782, %v800
        %v816 = vmul.f32 %v783, %v800
        %v817 = vmul.f32 %v784, %v800
        %v818 = vmul.f32 %v785, %v800
        %v819 = vmul.f32 %v786, %v800
        %v820 = vmul.f32 %v787, %v800
        %v821 = vmul.f32 %v788, %v800
        %v822 = vmul.f32 %v789, %v800
        %v823 = vmul.f32 %v790, %v800
        %v824 = vmul.f32 %v791, %v800
        %v825 = vmul.f32 %v792, %v800
        %v826 = vmul.f32 %v793, %v800
        %v827 = vmul.f32 %v794, %v800
        %v828 = vmul.f32 %v795, %v800
        %v829 = vmul.f32 %v796, %v800
        %v830 = vmul.f32 %v797, %v800
        %v831 = vmul.f32 %v798, %v800
        %v832 = vmul.f32 %v799, %v800
        %v833 = vadd.f32 %v736, %v801
        %v834 = vadd.f32 %v737, %v802
        %v835 = vadd.f32 %v738, %v803
        %v836 = vadd.f32 %v739, %v804
        %v837 = vadd.f32 %v740, %v805
        %v838 = vadd.f32 %v741, %v806
        %v839 = vadd.f32 %v742, %v807
        %v840 = vadd.f32 %v743, %v808
        %v841 = vadd.f32 %v744, %v809
        %v842 = vadd.f32 %v745, %v810
        %v843 = vadd.f32 %v746, %v811
        %v844 = vadd.f32 %v747, %v812
        %v845 = vadd.f32 %v748, %v813
        %v846 = vadd.f32 %v749, %v814
        %v847 = vadd.f32 %v750, %v815
        %v848 = vadd.f32 %v751, %v816
        %v849 = vadd.f32 %v752, %v817
        %v850 = vadd.f32 %v753, %v818
        %v851 = vadd.f32 %v754, %v819
        %v852 = vadd.f32 %v755, %v820
        %v853 = vadd.f32 %v756, %v821
        %v854 = vadd.f32 %v757, %v822
        %v855 = vadd.f32 %v758, %v823
        %v856 = vadd.f32 %v759, %v824
        %v857 = vadd.f32 %v760, %v825
        %v858 = vadd.f32 %v761, %v826
        %v859 = vadd.f32 %v762, %v827
        %v860 = vadd.f32 %v763, %v828
        %v861 = vadd.f32 %v764, %v829
        %v862 = vadd.f32 %v765, %v830
        %v863 = vadd.f32 %v766, %v831
        %v864 = vadd.f32 %v767, %v832
        %v865 = vld [vmem:[#allocation2 + $0x2] sm:$0xff]
        %v866 = vld [vmem:[#allocation2 + $0xa] sm:$0xff]
        %v867 = vld [vmem:[#allocation2 + $0x1a] sm:$0xff]
        %v868 = vld [vmem:[#allocation2 + $0x22] sm:$0xff]
        %v869 = vld [vmem:[#allocation2 + $0x32] sm:$0xff]
        %v870 = vld [vmem:[#allocation2 + $0x3a] sm:$0xff]
        %v871 = vld [vmem:[#allocation2 + $0x4a] sm:$0xff]
        %v872 = vld [vmem:[#allocation2 + $0x52] sm:$0xff]
        %v873 = vld [vmem:[#allocation2 + $0x62] sm:$0xff]
        %v874 = vld [vmem:[#allocation2 + $0x6a] sm:$0xff]
        %v875 = vld [vmem:[#allocation2 + $0x7a] sm:$0xff]
        %v876 = vld [vmem:[#allocation2 + $0x82] sm:$0xff]
        %v877 = vld [vmem:[#allocation2 + $0x92] sm:$0xff]
        %v878 = vld [vmem:[#allocation2 + $0x9a] sm:$0xff]
        %v879 = vld [vmem:[#allocation2 + $0xaa] sm:$0xff]
        %v880 = vld [vmem:[#allocation2 + $0xb2] sm:$0xff]
        %v881 = vld [vmem:[#allocation2 + $0xc2] sm:$0xff]
        %v882 = vld [vmem:[#allocation2 + $0xca] sm:$0xff]
        %v883 = vld [vmem:[#allocation2 + $0xda] sm:$0xff]
        %v884 = vld [vmem:[#allocation2 + $0xe2] sm:$0xff]
        %v885 = vld [vmem:[#allocation2 + $0xf2] sm:$0xff]
        %v886 = vld [vmem:[#allocation2 + $0xfa] sm:$0xff]
        %v887 = vld [vmem:[#allocation2 + $0x10a] sm:$0xff]
        %v888 = vld [vmem:[#allocation2 + $0x112] sm:$0xff]
        %v889 = vld [vmem:[#allocation2 + $0x122] sm:$0xff]
        %v890 = vld [vmem:[#allocation2 + $0x12a] sm:$0xff]
        %v891 = vld [vmem:[#allocation2 + $0x13a] sm:$0xff]
        %v892 = vld [vmem:[#allocation2 + $0x142] sm:$0xff]
        %v893 = vld [vmem:[#allocation2 + $0x152] sm:$0xff]
        %v894 = vld [vmem:[#allocation2 + $0x15a] sm:$0xff]
        %v895 = vld [vmem:[#allocation2 + $0x16a] sm:$0xff]
        %v896 = vld [vmem:[#allocation2 + $0x172] sm:$0xff]
        %v897 = vperm.slane %v668, 2
        %v898 = vmul.f32 %v865, %v897
        %v899 = vmul.f32 %v866, %v897
        %v900 = vmul.f32 %v867, %v897
        %v901 = vmul.f32 %v868, %v897
        %v902 = vmul.f32 %v869, %v897
        %v903 = vmul.f32 %v870, %v897
        %v904 = vmul.f32 %v871, %v897
        %v905 = vmul.f32 %v872, %v897
        %v906 = vmul.f32 %v873, %v897
        %v907 = vmul.f32 %v874, %v897
        %v908 = vmul.f32 %v875, %v897
        %v909 = vmul.f32 %v876, %v897
        %v910 = vmul.f32 %v877, %v897
        %v911 = vmul.f32 %v878, %v897
        %v912 = vmul.f32 %v879, %v897
        %v913 = vmul.f32 %v880, %v897
        %v914 = vmul.f32 %v881, %v897
        %v915 = vmul.f32 %v882, %v897
        %v916 = vmul.f32 %v883, %v897
        %v917 = vmul.f32 %v884, %v897
        %v918 = vmul.f32 %v885, %v897
        %v919 = vmul.f32 %v886, %v897
        %v920 = vmul.f32 %v887, %v897
        %v921 = vmul.f32 %v888, %v897
        %v922 = vmul.f32 %v889, %v897
        %v923 = vmul.f32 %v890, %v897
        %v924 = vmul.f32 %v891, %v897
        %v925 = vmul.f32 %v892, %v897
        %v926 = vmul.f32 %v893, %v897
        %v927 = vmul.f32 %v894, %v897
        %v928 = vmul.f32 %v895, %v897
        %v929 = vmul.f32 %v896, %v897
        %v930 = vadd.f32 %v833, %v898
        %v931 = vadd.f32 %v834, %v899
        %v932 = vadd.f32 %v835, %v900
        %v933 = vadd.f32 %v836, %v901
        %v934 = vadd.f32 %v837, %v902
        %v935 = vadd.f32 %v838, %v903
        %v936 = vadd.f32 %v839, %v904
        %v937 = vadd.f32 %v840, %v905
        %v938 = vadd.f32 %v841, %v906
        %v939 = vadd.f32 %v842, %v907
        %v940 = vadd.f32 %v843, %v908
        %v941 = vadd.f32 %v844, %v909
        %v942 = vadd.f32 %v845, %v910
        %v943 = vadd.f32 %v846, %v911
        %v944 = vadd.f32 %v847, %v912
        %v945 = vadd.f32 %v848, %v913
        %v946 = vadd.f32 %v849, %v914
        %v947 = vadd.f32 %v850, %v915
        %v948 = vadd.f32 %v851, %v916
        %v949 = vadd.f32 %v852, %v917
        %v950 = vadd.f32 %v853, %v918
        %v951 = vadd.f32 %v854, %v919
        %v952 = vadd.f32 %v855, %v920
        %v953 = vadd.f32 %v856, %v921
        %v954 = vadd.f32 %v857, %v922
        %v955 = vadd.f32 %v858, %v923
        %v956 = vadd.f32 %v859, %v924
        %v957 = vadd.f32 %v860, %v925
        %v958 = vadd.f32 %v861, %v926
        %v959 = vadd.f32 %v862, %v927
        %v960 = vadd.f32 %v863, %v928
        %v961 = vadd.f32 %v864, %v929
        %v962 = vld [vmem:[%s635] sm:$0xff]
        %v963 = vld [vmem:[%s635 + $0x8] sm:$0xff]
        %v964 = vld [vmem:[%s635 + $0x18] sm:$0xff]
        %v965 = vld [vmem:[%s635 + $0x20] sm:$0xff]
        %v966 = vld [vmem:[%s635 + $0x30] sm:$0xff]
        %v967 = vld [vmem:[%s635 + $0x38] sm:$0xff]
        %v968 = vld [vmem:[%s635 + $0x48] sm:$0xff]
        %v969 = vld [vmem:[%s635 + $0x50] sm:$0xff]
        %v970 = vld [vmem:[%s635 + $0x60] sm:$0xff]
        %v971 = vld [vmem:[%s635 + $0x68] sm:$0xff]
        %v972 = vld [vmem:[%s635 + $0x78] sm:$0xff]
        %v973 = vld [vmem:[%s635 + $0x80] sm:$0xff]
        %v974 = vld [vmem:[%s635 + $0x90] sm:$0xff]
        %v975 = vld [vmem:[%s635 + $0x98] sm:$0xff]
        %v976 = vld [vmem:[%s635 + $0xa8] sm:$0xff]
        %v977 = vld [vmem:[%s635 + $0xb0] sm:$0xff]
        %v978 = vld [vmem:[%s635 + $0xc0] sm:$0xff]
        %v979 = vld [vmem:[%s635 + $0xc8] sm:$0xff]
        %v980 = vld [vmem:[%s635 + $0xd8] sm:$0xff]
        %v981 = vld [vmem:[%s635 + $0xe0] sm:$0xff]
        %v982 = vld [vmem:[%s635 + $0xf0] sm:$0xff]
        %v983 = vld [vmem:[%s635 + $0xf8] sm:$0xff]
        %v984 = vld [vmem:[%s635 + $0x108] sm:$0xff]
        %v985 = vld [vmem:[%s635 + $0x110] sm:$0xff]
        %v986 = vld [vmem:[%s635 + $0x120] sm:$0xff]
        %v987 = vld [vmem:[%s635 + $0x128] sm:$0xff]
        %v988 = vld [vmem:[%s635 + $0x138] sm:$0xff]
        %v989 = vld [vmem:[%s635 + $0x140] sm:$0xff]
        %v990 = vld [vmem:[%s635 + $0x150] sm:$0xff]
        %v991 = vld [vmem:[%s635 + $0x158] sm:$0xff]
        %v992 = vld [vmem:[%s635 + $0x168] sm:$0xff]
        %v993 = vld [vmem:[%s635 + $0x170] sm:$0xff]
        %v994 = vperm.slane %v669, 0
        %v995 = vmul.f32 %v962, %v994
        %v996 = vmul.f32 %v963, %v994
        %v997 = vmul.f32 %v964, %v994
        %v998 = vmul.f32 %v965, %v994
        %v999 = vmul.f32 %v966, %v994
        %v1000 = vmul.f32 %v967, %v994
        %v1001 = vmul.f32 %v968, %v994
        %v1002 = vmul.f32 %v969, %v994
        %v1003 = vmul.f32 %v970, %v994
        %v1004 = vmul.f32 %v971, %v994
        %v1005 = vmul.f32 %v972, %v994
        %v1006 = vmul.f32 %v973, %v994
        %v1007 = vmul.f32 %v974, %v994
        %v1008 = vmul.f32 %v975, %v994
        %v1009 = vmul.f32 %v976, %v994
        %v1010 = vmul.f32 %v977, %v994
        %v1011 = vmul.f32 %v978, %v994
        %v1012 = vmul.f32 %v979, %v994
        %v1013 = vmul.f32 %v980, %v994
        %v1014 = vmul.f32 %v981, %v994
        %v1015 = vmul.f32 %v982, %v994
        %v1016 = vmul.f32 %v983, %v994
        %v1017 = vmul.f32 %v984, %v994
        %v1018 = vmul.f32 %v985, %v994
        %v1019 = vmul.f32 %v986, %v994
        %v1020 = vmul.f32 %v987, %v994
        %v1021 = vmul.f32 %v988, %v994
        %v1022 = vmul.f32 %v989, %v994
        %v1023 = vmul.f32 %v990, %v994
        %v1024 = vmul.f32 %v991, %v994
        %v1025 = vmul.f32 %v992, %v994
        %v1026 = vmul.f32 %v993, %v994
        %v1027 = vadd.f32 %v930, %v995
        %v1028 = vadd.f32 %v931, %v996
        %v1029 = vadd.f32 %v932, %v997
        %v1030 = vadd.f32 %v933, %v998
        %v1031 = vadd.f32 %v934, %v999
        %v1032 = vadd.f32 %v935, %v1000
        %v1033 = vadd.f32 %v936, %v1001
        %v1034 = vadd.f32 %v937, %v1002
        %v1035 = vadd.f32 %v938, %v1003
        %v1036 = vadd.f32 %v939, %v1004
        %v1037 = vadd.f32 %v940, %v1005
        %v1038 = vadd.f32 %v941, %v1006
        %v1039 = vadd.f32 %v942, %v1007
        %v1040 = vadd.f32 %v943, %v1008
        %v1041 = vadd.f32 %v944, %v1009
        %v1042 = vadd.f32 %v945, %v1010
        %v1043 = vadd.f32 %v946, %v1011
        %v1044 = vadd.f32 %v947, %v1012
        %v1045 = vadd.f32 %v948, %v1013
        %v1046 = vadd.f32 %v949, %v1014
        %v1047 = vadd.f32 %v950, %v1015
        %v1048 = vadd.f32 %v951, %v1016
        %v1049 = vadd.f32 %v952, %v1017
        %v1050 = vadd.f32 %v953, %v1018
        %v1051 = vadd.f32 %v954, %v1019
        %v1052 = vadd.f32 %v955, %v1020
        %v1053 = vadd.f32 %v956, %v1021
        %v1054 = vadd.f32 %v957, %v1022
        %v1055 = vadd.f32 %v958, %v1023
        %v1056 = vadd.f32 %v959, %v1024
        %v1057 = vadd.f32 %v960, %v1025
        %v1058 = vadd.f32 %v961, %v1026
        %v1059 = vld [vmem:[%s635 + $0x1] sm:$0xff]
        %v1060 = vld [vmem:[%s635 + $0x9] sm:$0xff]
        %v1061 = vld [vmem:[%s635 + $0x19] sm:$0xff]
        %v1062 = vld [vmem:[%s635 + $0x21] sm:$0xff]
        %v1063 = vld [vmem:[%s635 + $0x31] sm:$0xff]
        %v1064 = vld [vmem:[%s635 + $0x39] sm:$0xff]
        %v1065 = vld [vmem:[%s635 + $0x49] sm:$0xff]
        %v1066 = vld [vmem:[%s635 + $0x51] sm:$0xff]
        %v1067 = vld [vmem:[%s635 + $0x61] sm:$0xff]
        %v1068 = vld [vmem:[%s635 + $0x69] sm:$0xff]
        %v1069 = vld [vmem:[%s635 + $0x79] sm:$0xff]
        %v1070 = vld [vmem:[%s635 + $0x81] sm:$0xff]
        %v1071 = vld [vmem:[%s635 + $0x91] sm:$0xff]
        %v1072 = vld [vmem:[%s635 + $0x99] sm:$0xff]
        %v1073 = vld [vmem:[%s635 + $0xa9] sm:$0xff]
        %v1074 = vld [vmem:[%s635 + $0xb1] sm:$0xff]
        %v1075 = vld [vmem:[%s635 + $0xc1] sm:$0xff]
        %v1076 = vld [vmem:[%s635 + $0xc9] sm:$0xff]
        %v1077 = vld [vmem:[%s635 + $0xd9] sm:$0xff]
        %v1078 = vld [vmem:[%s635 + $0xe1] sm:$0xff]
        %v1079 = vld [vmem:[%s635 + $0xf1] sm:$0xff]
        %v1080 = vld [vmem:[%s635 + $0xf9] sm:$0xff]
        %v1081 = vld [vmem:[%s635 + $0x109] sm:$0xff]
        %v1082 = vld [vmem:[%s635 + $0x111] sm:$0xff]
        %v1083 = vld [vmem:[%s635 + $0x121] sm:$0xff]
        %v1084 = vld [vmem:[%s635 + $0x129] sm:$0xff]
        %v1085 = vld [vmem:[%s635 + $0x139] sm:$0xff]
        %v1086 = vld [vmem:[%s635 + $0x141] sm:$0xff]
        %v1087 = vld [vmem:[%s635 + $0x151] sm:$0xff]
        %v1088 = vld [vmem:[%s635 + $0x159] sm:$0xff]
        %v1089 = vld [vmem:[%s635 + $0x169] sm:$0xff]
        %v1090 = vld [vmem:[%s635 + $0x171] sm:$0xff]
        %v1091 = vperm.slane %v669, 1
        %v1092 = vmul.f32 %v1059, %v1091
        %v1093 = vmul.f32 %v1060, %v1091
        %v1094 = vmul.f32 %v1061, %v1091
        %v1095 = vmul.f32 %v1062, %v1091
        %v1096 = vmul.f32 %v1063, %v1091
        %v1097 = vmul.f32 %v1064, %v1091
        %v1098 = vmul.f32 %v1065, %v1091
        %v1099 = vmul.f32 %v1066, %v1091
        %v1100 = vmul.f32 %v1067, %v1091
        %v1101 = vmul.f32 %v1068, %v1091
        %v1102 = vmul.f32 %v1069, %v1091
        %v1103 = vmul.f32 %v1070, %v1091
        %v1104 = vmul.f32 %v1071, %v1091
        %v1105 = vmul.f32 %v1072, %v1091
        %v1106 = vmul.f32 %v1073, %v1091
        %v1107 = vmul.f32 %v1074, %v1091
        %v1108 = vmul.f32 %v1075, %v1091
        %v1109 = vmul.f32 %v1076, %v1091
        %v1110 = vmul.f32 %v1077, %v1091
        %v1111 = vmul.f32 %v1078, %v1091
        %v1112 = vmul.f32 %v1079, %v1091
        %v1113 = vmul.f32 %v1080, %v1091
        %v1114 = vmul.f32 %v1081, %v1091
        %v1115 = vmul.f32 %v1082, %v1091
        %v1116 = vmul.f32 %v1083, %v1091
        %v1117 = vmul.f32 %v1084, %v1091
        %v1118 = vmul.f32 %v1085, %v1091
        %v1119 = vmul.f32 %v1086, %v1091
        %v1120 = vmul.f32 %v1087, %v1091
        %v1121 = vmul.f32 %v1088, %v1091
        %v1122 = vmul.f32 %v1089, %v1091
        %v1123 = vmul.f32 %v1090, %v1091
        %v1124 = vadd.f32 %v1027, %v1092
        %v1125 = vadd.f32 %v1028, %v1093
        %v1126 = vadd.f32 %v1029, %v1094
        %v1127 = vadd.f32 %v1030, %v1095
        %v1128 = vadd.f32 %v1031, %v1096
        %v1129 = vadd.f32 %v1032, %v1097
        %v1130 = vadd.f32 %v1033, %v1098
        %v1131 = vadd.f32 %v1034, %v1099
        %v1132 = vadd.f32 %v1035, %v1100
        %v1133 = vadd.f32 %v1036, %v1101
        %v1134 = vadd.f32 %v1037, %v1102
        %v1135 = vadd.f32 %v1038, %v1103
        %v1136 = vadd.f32 %v1039, %v1104
        %v1137 = vadd.f32 %v1040, %v1105
        %v1138 = vadd.f32 %v1041, %v1106
        %v1139 = vadd.f32 %v1042, %v1107
        %v1140 = vadd.f32 %v1043, %v1108
        %v1141 = vadd.f32 %v1044, %v1109
        %v1142 = vadd.f32 %v1045, %v1110
        %v1143 = vadd.f32 %v1046, %v1111
        %v1144 = vadd.f32 %v1047, %v1112
        %v1145 = vadd.f32 %v1048, %v1113
        %v1146 = vadd.f32 %v1049, %v1114
        %v1147 = vadd.f32 %v1050, %v1115
        %v1148 = vadd.f32 %v1051, %v1116
        %v1149 = vadd.f32 %v1052, %v1117
        %v1150 = vadd.f32 %v1053, %v1118
        %v1151 = vadd.f32 %v1054, %v1119
        %v1152 = vadd.f32 %v1055, %v1120
        %v1153 = vadd.f32 %v1056, %v1121
        %v1154 = vadd.f32 %v1057, %v1122
        %v1155 = vadd.f32 %v1058, %v1123
        %v1156 = vld [vmem:[%s635 + $0x2] sm:$0xff]
        %v1157 = vld [vmem:[%s635 + $0xa] sm:$0xff]
        %v1158 = vld [vmem:[%s635 + $0x1a] sm:$0xff]
        %v1159 = vld [vmem:[%s635 + $0x22] sm:$0xff]
        %v1160 = vld [vmem:[%s635 + $0x32] sm:$0xff]
        %v1161 = vld [vmem:[%s635 + $0x3a] sm:$0xff]
        %v1162 = vld [vmem:[%s635 + $0x4a] sm:$0xff]
        %v1163 = vld [vmem:[%s635 + $0x52] sm:$0xff]
        %v1164 = vld [vmem:[%s635 + $0x62] sm:$0xff]
        %v1165 = vld [vmem:[%s635 + $0x6a] sm:$0xff]
        %v1166 = vld [vmem:[%s635 + $0x7a] sm:$0xff]
        %v1167 = vld [vmem:[%s635 + $0x82] sm:$0xff]
        %v1168 = vld [vmem:[%s635 + $0x92] sm:$0xff]
        %v1169 = vld [vmem:[%s635 + $0x9a] sm:$0xff]
        %v1170 = vld [vmem:[%s635 + $0xaa] sm:$0xff]
        %v1171 = vld [vmem:[%s635 + $0xb2] sm:$0xff]
        %v1172 = vld [vmem:[%s635 + $0xc2] sm:$0xff]
        %v1173 = vld [vmem:[%s635 + $0xca] sm:$0xff]
        %v1174 = vld [vmem:[%s635 + $0xda] sm:$0xff]
        %v1175 = vld [vmem:[%s635 + $0xe2] sm:$0xff]
        %v1176 = vld [vmem:[%s635 + $0xf2] sm:$0xff]
        %v1177 = vld [vmem:[%s635 + $0xfa] sm:$0xff]
        %v1178 = vld [vmem:[%s635 + $0x10a] sm:$0xff]
        %v1179 = vld [vmem:[%s635 + $0x112] sm:$0xff]
        %v1180 = vld [vmem:[%s635 + $0x122] sm:$0xff]
        %v1181 = vld [vmem:[%s635 + $0x12a] sm:$0xff]
        %v1182 = vld [vmem:[%s635 + $0x13a] sm:$0xff]
        %v1183 = vld [vmem:[%s635 + $0x142] sm:$0xff]
        %v1184 = vld [vmem:[%s635 + $0x152] sm:$0xff]
        %v1185 = vld [vmem:[%s635 + $0x15a] sm:$0xff]
        %v1186 = vld [vmem:[%s635 + $0x16a] sm:$0xff]
        %v1187 = vld [vmem:[%s635 + $0x172] sm:$0xff]
        %v1188 = vperm.slane %v669, 2
        %v1189 = vmul.f32 %v1156, %v1188
        %v1190 = vmul.f32 %v1157, %v1188
        %v1191 = vmul.f32 %v1158, %v1188
        %v1192 = vmul.f32 %v1159, %v1188
        %v1193 = vmul.f32 %v1160, %v1188
        %v1194 = vmul.f32 %v1161, %v1188
        %v1195 = vmul.f32 %v1162, %v1188
        %v1196 = vmul.f32 %v1163, %v1188
        %v1197 = vmul.f32 %v1164, %v1188
        %v1198 = vmul.f32 %v1165, %v1188
        %v1199 = vmul.f32 %v1166, %v1188
        %v1200 = vmul.f32 %v1167, %v1188
        %v1201 = vmul.f32 %v1168, %v1188
        %v1202 = vmul.f32 %v1169, %v1188
        %v1203 = vmul.f32 %v1170, %v1188
        %v1204 = vmul.f32 %v1171, %v1188
        %v1205 = vmul.f32 %v1172, %v1188
        %v1206 = vmul.f32 %v1173, %v1188
        %v1207 = vmul.f32 %v1174, %v1188
        %v1208 = vmul.f32 %v1175, %v1188
        %v1209 = vmul.f32 %v1176, %v1188
        %v1210 = vmul.f32 %v1177, %v1188
        %v1211 = vmul.f32 %v1178, %v1188
        %v1212 = vmul.f32 %v1179, %v1188
        %v1213 = vmul.f32 %v1180, %v1188
        %v1214 = vmul.f32 %v1181, %v1188
        %v1215 = vmul.f32 %v1182, %v1188
        %v1216 = vmul.f32 %v1183, %v1188
        %v1217 = vmul.f32 %v1184, %v1188
        %v1218 = vmul.f32 %v1185, %v1188
        %v1219 = vmul.f32 %v1186, %v1188
        %v1220 = vmul.f32 %v1187, %v1188
        %v1221 = vadd.f32 %v1124, %v1189
        %v1222 = vadd.f32 %v1125, %v1190
        %v1223 = vadd.f32 %v1126, %v1191
        %v1224 = vadd.f32 %v1127, %v1192
        %v1225 = vadd.f32 %v1128, %v1193
        %v1226 = vadd.f32 %v1129, %v1194
        %v1227 = vadd.f32 %v1130, %v1195
        %v1228 = vadd.f32 %v1131, %v1196
        %v1229 = vadd.f32 %v1132, %v1197
        %v1230 = vadd.f32 %v1133, %v1198
        %v1231 = vadd.f32 %v1134, %v1199
        %v1232 = vadd.f32 %v1135, %v1200
        %v1233 = vadd.f32 %v1136, %v1201
        %v1234 = vadd.f32 %v1137, %v1202
        %v1235 = vadd.f32 %v1138, %v1203
        %v1236 = vadd.f32 %v1139, %v1204
        %v1237 = vadd.f32 %v1140, %v1205
        %v1238 = vadd.f32 %v1141, %v1206
        %v1239 = vadd.f32 %v1142, %v1207
        %v1240 = vadd.f32 %v1143, %v1208
        %v1241 = vadd.f32 %v1144, %v1209
        %v1242 = vadd.f32 %v1145, %v1210
        %v1243 = vadd.f32 %v1146, %v1211
        %v1244 = vadd.f32 %v1147, %v1212
        %v1245 = vadd.f32 %v1148, %v1213
        %v1246 = vadd.f32 %v1149, %v1214
        %v1247 = vadd.f32 %v1150, %v1215
        %v1248 = vadd.f32 %v1151, %v1216
        %v1249 = vadd.f32 %v1152, %v1217
        %v1250 = vadd.f32 %v1153, %v1218
        %v1251 = vadd.f32 %v1154, %v1219
        %v1252 = vadd.f32 %v1155, %v1220
        %s1253 = scalar_lea.vmem [#allocation2], 48
        %v1254 = vld [vmem:[%s1253] sm:$0xff]
        %v1255 = vld [vmem:[%s1253 + $0x8] sm:$0xff]
        %v1256 = vld [vmem:[%s1253 + $0x18] sm:$0xff]
        %v1257 = vld [vmem:[%s1253 + $0x20] sm:$0xff]
        %v1258 = vld [vmem:[%s1253 + $0x30] sm:$0xff]
        %v1259 = vld [vmem:[%s1253 + $0x38] sm:$0xff]
        %v1260 = vld [vmem:[%s1253 + $0x48] sm:$0xff]
        %v1261 = vld [vmem:[%s1253 + $0x50] sm:$0xff]
        %v1262 = vld [vmem:[%s1253 + $0x60] sm:$0xff]
        %v1263 = vld [vmem:[%s1253 + $0x68] sm:$0xff]
        %v1264 = vld [vmem:[%s1253 + $0x78] sm:$0xff]
        %v1265 = vld [vmem:[%s1253 + $0x80] sm:$0xff]
        %v1266 = vld [vmem:[%s1253 + $0x90] sm:$0xff]
        %v1267 = vld [vmem:[%s1253 + $0x98] sm:$0xff]
        %v1268 = vld [vmem:[%s1253 + $0xa8] sm:$0xff]
        %v1269 = vld [vmem:[%s1253 + $0xb0] sm:$0xff]
        %v1270 = vld [vmem:[%s1253 + $0xc0] sm:$0xff]
        %v1271 = vld [vmem:[%s1253 + $0xc8] sm:$0xff]
        %v1272 = vld [vmem:[%s1253 + $0xd8] sm:$0xff]
        %v1273 = vld [vmem:[%s1253 + $0xe0] sm:$0xff]
        %v1274 = vld [vmem:[%s1253 + $0xf0] sm:$0xff]
        %v1275 = vld [vmem:[%s1253 + $0xf8] sm:$0xff]
        %v1276 = vld [vmem:[%s1253 + $0x108] sm:$0xff]
        %v1277 = vld [vmem:[%s1253 + $0x110] sm:$0xff]
        %v1278 = vld [vmem:[%s1253 + $0x120] sm:$0xff]
        %v1279 = vld [vmem:[%s1253 + $0x128] sm:$0xff]
        %v1280 = vld [vmem:[%s1253 + $0x138] sm:$0xff]
        %v1281 = vld [vmem:[%s1253 + $0x140] sm:$0xff]
        %v1282 = vld [vmem:[%s1253 + $0x150] sm:$0xff]
        %v1283 = vld [vmem:[%s1253 + $0x158] sm:$0xff]
        %v1284 = vld [vmem:[%s1253 + $0x168] sm:$0xff]
        %v1285 = vld [vmem:[%s1253 + $0x170] sm:$0xff]
        %v1286 = vperm.slane %v670, 0
        %v1287 = vmul.f32 %v1254, %v1286
        %v1288 = vmul.f32 %v1255, %v1286
        %v1289 = vmul.f32 %v1256, %v1286
        %v1290 = vmul.f32 %v1257, %v1286
        %v1291 = vmul.f32 %v1258, %v1286
        %v1292 = vmul.f32 %v1259, %v1286
        %v1293 = vmul.f32 %v1260, %v1286
        %v1294 = vmul.f32 %v1261, %v1286
        %v1295 = vmul.f32 %v1262, %v1286
        %v1296 = vmul.f32 %v1263, %v1286
        %v1297 = vmul.f32 %v1264, %v1286
        %v1298 = vmul.f32 %v1265, %v1286
        %v1299 = vmul.f32 %v1266, %v1286
        %v1300 = vmul.f32 %v1267, %v1286
        %v1301 = vmul.f32 %v1268, %v1286
        %v1302 = vmul.f32 %v1269, %v1286
        %v1303 = vmul.f32 %v1270, %v1286
        %v1304 = vmul.f32 %v1271, %v1286
        %v1305 = vmul.f32 %v1272, %v1286
        %v1306 = vmul.f32 %v1273, %v1286
        %v1307 = vmul.f32 %v1274, %v1286
        %v1308 = vmul.f32 %v1275, %v1286
        %v1309 = vmul.f32 %v1276, %v1286
        %v1310 = vmul.f32 %v1277, %v1286
        %v1311 = vmul.f32 %v1278, %v1286
        %v1312 = vmul.f32 %v1279, %v1286
        %v1313 = vmul.f32 %v1280, %v1286
        %v1314 = vmul.f32 %v1281, %v1286
        %v1315 = vmul.f32 %v1282, %v1286
        %v1316 = vmul.f32 %v1283, %v1286
        %v1317 = vmul.f32 %v1284, %v1286
        %v1318 = vmul.f32 %v1285, %v1286
        %v1319 = vadd.f32 %v1221, %v1287
        %v1320 = vadd.f32 %v1222, %v1288
        %v1321 = vadd.f32 %v1223, %v1289
        %v1322 = vadd.f32 %v1224, %v1290
        %v1323 = vadd.f32 %v1225, %v1291
        %v1324 = vadd.f32 %v1226, %v1292
        %v1325 = vadd.f32 %v1227, %v1293
        %v1326 = vadd.f32 %v1228, %v1294
        %v1327 = vadd.f32 %v1229, %v1295
        %v1328 = vadd.f32 %v1230, %v1296
        %v1329 = vadd.f32 %v1231, %v1297
        %v1330 = vadd.f32 %v1232, %v1298
        %v1331 = vadd.f32 %v1233, %v1299
        %v1332 = vadd.f32 %v1234, %v1300
        %v1333 = vadd.f32 %v1235, %v1301
        %v1334 = vadd.f32 %v1236, %v1302
        %v1335 = vadd.f32 %v1237, %v1303
        %v1336 = vadd.f32 %v1238, %v1304
        %v1337 = vadd.f32 %v1239, %v1305
        %v1338 = vadd.f32 %v1240, %v1306
        %v1339 = vadd.f32 %v1241, %v1307
        %v1340 = vadd.f32 %v1242, %v1308
        %v1341 = vadd.f32 %v1243, %v1309
        %v1342 = vadd.f32 %v1244, %v1310
        %v1343 = vadd.f32 %v1245, %v1311
        %v1344 = vadd.f32 %v1246, %v1312
        %v1345 = vadd.f32 %v1247, %v1313
        %v1346 = vadd.f32 %v1248, %v1314
        %v1347 = vadd.f32 %v1249, %v1315
        %v1348 = vadd.f32 %v1250, %v1316
        %v1349 = vadd.f32 %v1251, %v1317
        %v1350 = vadd.f32 %v1252, %v1318
        %v1351 = vld [vmem:[%s1253 + $0x1] sm:$0xff]
        %v1352 = vld [vmem:[%s1253 + $0x9] sm:$0xff]
        %v1353 = vld [vmem:[%s1253 + $0x19] sm:$0xff]
        %v1354 = vld [vmem:[%s1253 + $0x21] sm:$0xff]
        %v1355 = vld [vmem:[%s1253 + $0x31] sm:$0xff]
        %v1356 = vld [vmem:[%s1253 + $0x39] sm:$0xff]
        %v1357 = vld [vmem:[%s1253 + $0x49] sm:$0xff]
        %v1358 = vld [vmem:[%s1253 + $0x51] sm:$0xff]
        %v1359 = vld [vmem:[%s1253 + $0x61] sm:$0xff]
        %v1360 = vld [vmem:[%s1253 + $0x69] sm:$0xff]
        %v1361 = vld [vmem:[%s1253 + $0x79] sm:$0xff]
        %v1362 = vld [vmem:[%s1253 + $0x81] sm:$0xff]
        %v1363 = vld [vmem:[%s1253 + $0x91] sm:$0xff]
        %v1364 = vld [vmem:[%s1253 + $0x99] sm:$0xff]
        %v1365 = vld [vmem:[%s1253 + $0xa9] sm:$0xff]
        %v1366 = vld [vmem:[%s1253 + $0xb1] sm:$0xff]
        %v1367 = vld [vmem:[%s1253 + $0xc1] sm:$0xff]
        %v1368 = vld [vmem:[%s1253 + $0xc9] sm:$0xff]
        %v1369 = vld [vmem:[%s1253 + $0xd9] sm:$0xff]
        %v1370 = vld [vmem:[%s1253 + $0xe1] sm:$0xff]
        %v1371 = vld [vmem:[%s1253 + $0xf1] sm:$0xff]
        %v1372 = vld [vmem:[%s1253 + $0xf9] sm:$0xff]
        %v1373 = vld [vmem:[%s1253 + $0x109] sm:$0xff]
        %v1374 = vld [vmem:[%s1253 + $0x111] sm:$0xff]
        %v1375 = vld [vmem:[%s1253 + $0x121] sm:$0xff]
        %v1376 = vld [vmem:[%s1253 + $0x129] sm:$0xff]
        %v1377 = vld [vmem:[%s1253 + $0x139] sm:$0xff]
        %v1378 = vld [vmem:[%s1253 + $0x141] sm:$0xff]
        %v1379 = vld [vmem:[%s1253 + $0x151] sm:$0xff]
        %v1380 = vld [vmem:[%s1253 + $0x159] sm:$0xff]
        %v1381 = vld [vmem:[%s1253 + $0x169] sm:$0xff]
        %v1382 = vld [vmem:[%s1253 + $0x171] sm:$0xff]
        %v1383 = vperm.slane %v670, 1
        %v1384 = vmul.f32 %v1351, %v1383
        %v1385 = vmul.f32 %v1352, %v1383
        %v1386 = vmul.f32 %v1353, %v1383
        %v1387 = vmul.f32 %v1354, %v1383
        %v1388 = vmul.f32 %v1355, %v1383
        %v1389 = vmul.f32 %v1356, %v1383
        %v1390 = vmul.f32 %v1357, %v1383
        %v1391 = vmul.f32 %v1358, %v1383
        %v1392 = vmul.f32 %v1359, %v1383
        %v1393 = vmul.f32 %v1360, %v1383
        %v1394 = vmul.f32 %v1361, %v1383
        %v1395 = vmul.f32 %v1362, %v1383
        %v1396 = vmul.f32 %v1363, %v1383
        %v1397 = vmul.f32 %v1364, %v1383
        %v1398 = vmul.f32 %v1365, %v1383
        %v1399 = vmul.f32 %v1366, %v1383
        %v1400 = vmul.f32 %v1367, %v1383
        %v1401 = vmul.f32 %v1368, %v1383
        %v1402 = vmul.f32 %v1369, %v1383
        %v1403 = vmul.f32 %v1370, %v1383
        %v1404 = vmul.f32 %v1371, %v1383
        %v1405 = vmul.f32 %v1372, %v1383
        %v1406 = vmul.f32 %v1373, %v1383
        %v1407 = vmul.f32 %v1374, %v1383
        %v1408 = vmul.f32 %v1375, %v1383
        %v1409 = vmul.f32 %v1376, %v1383
        %v1410 = vmul.f32 %v1377, %v1383
        %v1411 = vmul.f32 %v1378, %v1383
        %v1412 = vmul.f32 %v1379, %v1383
        %v1413 = vmul.f32 %v1380, %v1383
        %v1414 = vmul.f32 %v1381, %v1383
        %v1415 = vmul.f32 %v1382, %v1383
        %v1416 = vadd.f32 %v1319, %v1384
        %v1417 = vadd.f32 %v1320, %v1385
        %v1418 = vadd.f32 %v1321, %v1386
        %v1419 = vadd.f32 %v1322, %v1387
        %v1420 = vadd.f32 %v1323, %v1388
        %v1421 = vadd.f32 %v1324, %v1389
        %v1422 = vadd.f32 %v1325, %v1390
        %v1423 = vadd.f32 %v1326, %v1391
        %v1424 = vadd.f32 %v1327, %v1392
        %v1425 = vadd.f32 %v1328, %v1393
        %v1426 = vadd.f32 %v1329, %v1394
        %v1427 = vadd.f32 %v1330, %v1395
        %v1428 = vadd.f32 %v1331, %v1396
        %v1429 = vadd.f32 %v1332, %v1397
        %v1430 = vadd.f32 %v1333, %v1398
        %v1431 = vadd.f32 %v1334, %v1399
        %v1432 = vadd.f32 %v1335, %v1400
        %v1433 = vadd.f32 %v1336, %v1401
        %v1434 = vadd.f32 %v1337, %v1402
        %v1435 = vadd.f32 %v1338, %v1403
        %v1436 = vadd.f32 %v1339, %v1404
        %v1437 = vadd.f32 %v1340, %v1405
        %v1438 = vadd.f32 %v1341, %v1406
        %v1439 = vadd.f32 %v1342, %v1407
        %v1440 = vadd.f32 %v1343, %v1408
        %v1441 = vadd.f32 %v1344, %v1409
        %v1442 = vadd.f32 %v1345, %v1410
        %v1443 = vadd.f32 %v1346, %v1411
        %v1444 = vadd.f32 %v1347, %v1412
        %v1445 = vadd.f32 %v1348, %v1413
        %v1446 = vadd.f32 %v1349, %v1414
        %v1447 = vadd.f32 %v1350, %v1415
        %v1448 = vld [vmem:[%s1253 + $0x2] sm:$0xff]
        %v1449 = vld [vmem:[%s1253 + $0xa] sm:$0xff]
        %v1450 = vld [vmem:[%s1253 + $0x1a] sm:$0xff]
        %v1451 = vld [vmem:[%s1253 + $0x22] sm:$0xff]
        %v1452 = vld [vmem:[%s1253 + $0x32] sm:$0xff]
        %v1453 = vld [vmem:[%s1253 + $0x3a] sm:$0xff]
        %v1454 = vld [vmem:[%s1253 + $0x4a] sm:$0xff]
        %v1455 = vld [vmem:[%s1253 + $0x52] sm:$0xff]
        %v1456 = vld [vmem:[%s1253 + $0x62] sm:$0xff]
        %v1457 = vld [vmem:[%s1253 + $0x6a] sm:$0xff]
        %v1458 = vld [vmem:[%s1253 + $0x7a] sm:$0xff]
        %v1459 = vld [vmem:[%s1253 + $0x82] sm:$0xff]
        %v1460 = vld [vmem:[%s1253 + $0x92] sm:$0xff]
        %v1461 = vld [vmem:[%s1253 + $0x9a] sm:$0xff]
        %v1462 = vld [vmem:[%s1253 + $0xaa] sm:$0xff]
        %v1463 = vld [vmem:[%s1253 + $0xb2] sm:$0xff]
        %v1464 = vld [vmem:[%s1253 + $0xc2] sm:$0xff]
        %v1465 = vld [vmem:[%s1253 + $0xca] sm:$0xff]
        %v1466 = vld [vmem:[%s1253 + $0xda] sm:$0xff]
        %v1467 = vld [vmem:[%s1253 + $0xe2] sm:$0xff]
        %v1468 = vld [vmem:[%s1253 + $0xf2] sm:$0xff]
        %v1469 = vld [vmem:[%s1253 + $0xfa] sm:$0xff]
        %v1470 = vld [vmem:[%s1253 + $0x10a] sm:$0xff]
        %v1471 = vld [vmem:[%s1253 + $0x112] sm:$0xff]
        %v1472 = vld [vmem:[%s1253 + $0x122] sm:$0xff]
        %v1473 = vld [vmem:[%s1253 + $0x12a] sm:$0xff]
        %v1474 = vld [vmem:[%s1253 + $0x13a] sm:$0xff]
        %v1475 = vld [vmem:[%s1253 + $0x142] sm:$0xff]
        %v1476 = vld [vmem:[%s1253 + $0x152] sm:$0xff]
        %v1477 = vld [vmem:[%s1253 + $0x15a] sm:$0xff]
        %v1478 = vld [vmem:[%s1253 + $0x16a] sm:$0xff]
        %v1479 = vld [vmem:[%s1253 + $0x172] sm:$0xff]
        %v1480 = vperm.slane %v670, 2
        %v1481 = vmul.f32 %v1448, %v1480
        %v1482 = vmul.f32 %v1449, %v1480
        %v1483 = vmul.f32 %v1450, %v1480
        %v1484 = vmul.f32 %v1451, %v1480
        %v1485 = vmul.f32 %v1452, %v1480
        %v1486 = vmul.f32 %v1453, %v1480
        %v1487 = vmul.f32 %v1454, %v1480
        %v1488 = vmul.f32 %v1455, %v1480
        %v1489 = vmul.f32 %v1456, %v1480
        %v1490 = vmul.f32 %v1457, %v1480
        %v1491 = vmul.f32 %v1458, %v1480
        %v1492 = vmul.f32 %v1459, %v1480
        %v1493 = vmul.f32 %v1460, %v1480
        %v1494 = vmul.f32 %v1461, %v1480
        %v1495 = vmul.f32 %v1462, %v1480
        %v1496 = vmul.f32 %v1463, %v1480
        %v1497 = vmul.f32 %v1464, %v1480
        %v1498 = vmul.f32 %v1465, %v1480
        %v1499 = vmul.f32 %v1466, %v1480
        %v1500 = vmul.f32 %v1467, %v1480
        %v1501 = vmul.f32 %v1468, %v1480
        %v1502 = vmul.f32 %v1469, %v1480
        %v1503 = vmul.f32 %v1470, %v1480
        %v1504 = vmul.f32 %v1471, %v1480
        %v1505 = vmul.f32 %v1472, %v1480
        %v1506 = vmul.f32 %v1473, %v1480
        %v1507 = vmul.f32 %v1474, %v1480
        %v1508 = vmul.f32 %v1475, %v1480
        %v1509 = vmul.f32 %v1476, %v1480
        %v1510 = vmul.f32 %v1477, %v1480
        %v1511 = vmul.f32 %v1478, %v1480
        %v1512 = vmul.f32 %v1479, %v1480
        %v1513 = vadd.f32 %v1416, %v1481
        %v1514 = vadd.f32 %v1417, %v1482
        %v1515 = vadd.f32 %v1418, %v1483
        %v1516 = vadd.f32 %v1419, %v1484
        %v1517 = vadd.f32 %v1420, %v1485
        %v1518 = vadd.f32 %v1421, %v1486
        %v1519 = vadd.f32 %v1422, %v1487
        %v1520 = vadd.f32 %v1423, %v1488
        %v1521 = vadd.f32 %v1424, %v1489
        %v1522 = vadd.f32 %v1425, %v1490
        %v1523 = vadd.f32 %v1426, %v1491
        %v1524 = vadd.f32 %v1427, %v1492
        %v1525 = vadd.f32 %v1428, %v1493
        %v1526 = vadd.f32 %v1429, %v1494
        %v1527 = vadd.f32 %v1430, %v1495
        %v1528 = vadd.f32 %v1431, %v1496
        %v1529 = vadd.f32 %v1432, %v1497
        %v1530 = vadd.f32 %v1433, %v1498
        %v1531 = vadd.f32 %v1434, %v1499
        %v1532 = vadd.f32 %v1435, %v1500
        %v1533 = vadd.f32 %v1436, %v1501
        %v1534 = vadd.f32 %v1437, %v1502
        %v1535 = vadd.f32 %v1438, %v1503
        %v1536 = vadd.f32 %v1439, %v1504
        %v1537 = vadd.f32 %v1440, %v1505
        %v1538 = vadd.f32 %v1441, %v1506
        %v1539 = vadd.f32 %v1442, %v1507
        %v1540 = vadd.f32 %v1443, %v1508
        %v1541 = vadd.f32 %v1444, %v1509
        %v1542 = vadd.f32 %v1445, %v1510
        %v1543 = vadd.f32 %v1446, %v1511
        %v1544 = vadd.f32 %v1447, %v1512
        %v1545 = vld [vmem:[%s4] sm:$0x1]
        %v1547 = vperm.slane %v1545, 0
        %v1549 = vadd.f32 %v1513, %v1547
        %v1550 = vadd.f32 %v1514, %v1547
        %v1551 = vadd.f32 %v1515, %v1547
        %v1552 = vadd.f32 %v1516, %v1547
        %v1553 = vadd.f32 %v1517, %v1547
        %v1554 = vadd.f32 %v1518, %v1547
        %v1555 = vadd.f32 %v1519, %v1547
        %v1556 = vadd.f32 %v1520, %v1547
        %v1557 = vadd.f32 %v1521, %v1547
        %v1558 = vadd.f32 %v1522, %v1547
        %v1559 = vadd.f32 %v1523, %v1547
        %v1560 = vadd.f32 %v1524, %v1547
        %v1561 = vadd.f32 %v1525, %v1547
        %v1562 = vadd.f32 %v1526, %v1547
        %v1563 = vadd.f32 %v1527, %v1547
        %v1564 = vadd.f32 %v1528, %v1547
        %v1565 = vadd.f32 %v1529, %v1547
        %v1566 = vadd.f32 %v1530, %v1547
        %v1567 = vadd.f32 %v1531, %v1547
        %v1568 = vadd.f32 %v1532, %v1547
        %v1569 = vadd.f32 %v1533, %v1547
        %v1570 = vadd.f32 %v1534, %v1547
        %v1571 = vadd.f32 %v1535, %v1547
        %v1572 = vadd.f32 %v1536, %v1547
        %v1573 = vadd.f32 %v1537, %v1547
        %v1574 = vadd.f32 %v1538, %v1547
        %v1575 = vadd.f32 %v1539, %v1547
        %v1576 = vadd.f32 %v1540, %v1547
        %v1577 = vadd.f32 %v1541, %v1547
        %v1578 = vadd.f32 %v1542, %v1547
        %v1579 = vadd.f32 %v1543, %v1547
        %v1580 = vadd.f32 %v1544, %v1547
        %v1581 = vmax.f32 %v1549, 0.0
        %v1582 = vmax.f32 %v1550, 0.0
        %v1583 = vmax.f32 %v1551, 0.0
        %v1584 = vmax.f32 %v1552, 0.0
        %v1585 = vmax.f32 %v1553, 0.0
        %v1586 = vmax.f32 %v1554, 0.0
        %v1587 = vmax.f32 %v1555, 0.0
        %v1588 = vmax.f32 %v1556, 0.0
        %v1589 = vmax.f32 %v1557, 0.0
        %v1590 = vmax.f32 %v1558, 0.0
        %v1591 = vmax.f32 %v1559, 0.0
        %v1592 = vmax.f32 %v1560, 0.0
        %v1593 = vmax.f32 %v1561, 0.0
        %v1594 = vmax.f32 %v1562, 0.0
        %v1595 = vmax.f32 %v1563, 0.0
        %v1596 = vmax.f32 %v1564, 0.0
        %v1597 = vmax.f32 %v1565, 0.0
        %v1598 = vmax.f32 %v1566, 0.0
        %v1599 = vmax.f32 %v1567, 0.0
        %v1600 = vmax.f32 %v1568, 0.0
        %v1601 = vmax.f32 %v1569, 0.0
        %v1602 = vmax.f32 %v1570, 0.0
        %v1603 = vmax.f32 %v1571, 0.0
        %v1604 = vmax.f32 %v1572, 0.0
        %v1605 = vmax.f32 %v1573, 0.0
        %v1606 = vmax.f32 %v1574, 0.0
        %v1607 = vmax.f32 %v1575, 0.0
        %v1608 = vmax.f32 %v1576, 0.0
        %v1609 = vmax.f32 %v1577, 0.0
        %v1610 = vmax.f32 %v1578, 0.0
        %v1611 = vmax.f32 %v1579, 0.0
        %v1612 = vmax.f32 %v1580, 0.0
        %v1613 = vld [vmem:[%s5] sm:$0xf]
        %v1614 = vld [vmem:[%s6] sm:$0x1]
        %v1616 = vperm.slane %v1614, 0
        %v1619 = vsel %vm579, %v1581, 0
        %v1622 = vsel %vm579, %v1582, 0
        %v1625 = vsel %vm579, %v1583, 0
        %v1628 = vsel %vm579, %v1584, 0
        %v1631 = vsel %vm579, %v1585, 0
        %v1634 = vsel %vm579, %v1586, 0
        %v1637 = vsel %vm579, %v1587, 0
        %v1640 = vsel %vm579, %v1588, 0
        %v1643 = vsel %vm579, %v1589, 0
        %v1646 = vsel %vm579, %v1590, 0
        %v1649 = vsel %vm579, %v1591, 0
        %v1652 = vsel %vm579, %v1592, 0
        %v1655 = vsel %vm579, %v1593, 0
        %v1658 = vsel %vm579, %v1594, 0
        %v1661 = vsel %vm579, %v1595, 0
        %v1664 = vsel %vm579, %v1596, 0
        %v1667 = vsel %vm579, %v1597, 0
        %v1670 = vsel %vm579, %v1598, 0
        %v1673 = vsel %vm579, %v1599, 0
        %v1676 = vsel %vm579, %v1600, 0
        %v1679 = vsel %vm579, %v1601, 0
        %v1682 = vsel %vm579, %v1602, 0
        %v1685 = vsel %vm579, %v1603, 0
        %v1688 = vsel %vm579, %v1604, 0
        %v1691 = vsel %vm579, %v1605, 0
        %v1694 = vsel %vm579, %v1606, 0
        %v1697 = vsel %vm579, %v1607, 0
        %v1700 = vsel %vm579, %v1608, 0
        %v1703 = vsel %vm579, %v1609, 0
        %v1706 = vsel %vm579, %v1610, 0
        %v1709 = vsel %vm579, %v1611, 0
        %v1712 = vsel %vm579, %v1612, 0
        %vm1714 = vcmask 1043456
        %v1716 = vsel %vm1714, %v1613, 0
        %1718 = vmatpush.msra.mxu0 0.0
        %1719 = vmatpush.msra.mxu0 0.0
        %1720 = vmatpush.msra.mxu0 0.0
        %1721 = vmatpush.msra.mxu0 0.0
        %1722 = vmatpush.msra.mxu0 0.0
        %1723 = vmatpush.msra.mxu0 0.0
        %1724 = vmatpush.msra.mxu0 0.0
        %1725 = vmatpush.msra.mxu0 0.0
        %1726 = vmatpush.msra.mxu0 0.0
        %1727 = vmatpush.msra.mxu0 0.0
        %1728 = vmatpush.msra.mxu0 0.0
        %1729 = vmatpush.msra.mxu0 0.0
        %1730 = vmatpush.msra.mxu0 0.0
        %1731 = vmatpush.msra.mxu0 0.0
        %1732 = vmatpush.msra.mxu0 0.0
        %1733 = vmatpush.msra.mxu0 %v1716
        %1734 = vmatmul.f32.gmra.mxu0 %v1619
        %v1735 = vpop.f32.mrf.mxu0
        %v1736 = vadd.f32 %v1616, %v1735
        %1737 = vmatmul.f32.gmra.mxu0 %v1622
        %v1738 = vpop.f32.mrf.mxu0
        %v1739 = vadd.f32 %v1616, %v1738
        %1740 = vmatmul.f32.gmra.mxu0 %v1625
        %v1741 = vpop.f32.mrf.mxu0
        %v1742 = vadd.f32 %v1616, %v1741
        %1743 = vmatmul.f32.gmra.mxu0 %v1628
        %v1744 = vpop.f32.mrf.mxu0
        %v1745 = vadd.f32 %v1616, %v1744
        %1746 = vmatmul.f32.gmra.mxu0 %v1631
        %v1747 = vpop.f32.mrf.mxu0
        %v1748 = vadd.f32 %v1616, %v1747
        %1749 = vmatmul.f32.gmra.mxu0 %v1634
        %v1750 = vpop.f32.mrf.mxu0
        %v1751 = vadd.f32 %v1616, %v1750
        %1752 = vmatmul.f32.gmra.mxu0 %v1637
        %v1753 = vpop.f32.mrf.mxu0
        %v1754 = vadd.f32 %v1616, %v1753
        %1755 = vmatmul.f32.gmra.mxu0 %v1640
        %v1756 = vpop.f32.mrf.mxu0
        %v1757 = vadd.f32 %v1616, %v1756
        %1758 = vmatmul.f32.gmra.mxu0 %v1643
        %v1759 = vpop.f32.mrf.mxu0
        %v1760 = vadd.f32 %v1616, %v1759
        %1761 = vmatmul.f32.gmra.mxu0 %v1646
        %v1762 = vpop.f32.mrf.mxu0
        %v1763 = vadd.f32 %v1616, %v1762
        %1764 = vmatmul.f32.gmra.mxu0 %v1649
        %v1765 = vpop.f32.mrf.mxu0
        %v1766 = vadd.f32 %v1616, %v1765
        %1767 = vmatmul.f32.gmra.mxu0 %v1652
        %v1768 = vpop.f32.mrf.mxu0
        %v1769 = vadd.f32 %v1616, %v1768
        %1770 = vmatmul.f32.gmra.mxu0 %v1655
        %v1771 = vpop.f32.mrf.mxu0
        %v1772 = vadd.f32 %v1616, %v1771
        %1773 = vmatmul.f32.gmra.mxu0 %v1658
        %v1774 = vpop.f32.mrf.mxu0
        %v1775 = vadd.f32 %v1616, %v1774
        %1776 = vmatmul.f32.gmra.mxu0 %v1661
        %v1777 = vpop.f32.mrf.mxu0
        %v1778 = vadd.f32 %v1616, %v1777
        %1779 = vmatmul.f32.gmra.mxu0 %v1664
        %v1780 = vpop.f32.mrf.mxu0
        %v1781 = vadd.f32 %v1616, %v1780
        %1782 = vmatmul.f32.gmra.mxu0 %v1667
        %v1783 = vpop.f32.mrf.mxu0
        %v1784 = vadd.f32 %v1616, %v1783
        %1785 = vmatmul.f32.gmra.mxu0 %v1670
        %v1786 = vpop.f32.mrf.mxu0
        %v1787 = vadd.f32 %v1616, %v1786
        %1788 = vmatmul.f32.gmra.mxu0 %v1673
        %v1789 = vpop.f32.mrf.mxu0
        %v1790 = vadd.f32 %v1616, %v1789
        %1791 = vmatmul.f32.gmra.mxu0 %v1676
        %v1792 = vpop.f32.mrf.mxu0
        %v1793 = vadd.f32 %v1616, %v1792
        %1794 = vmatmul.f32.gmra.mxu0 %v1679
        %v1795 = vpop.f32.mrf.mxu0
        %v1796 = vadd.f32 %v1616, %v1795
        %1797 = vmatmul.f32.gmra.mxu0 %v1682
        %v1798 = vpop.f32.mrf.mxu0
        %v1799 = vadd.f32 %v1616, %v1798
        %1800 = vmatmul.f32.gmra.mxu0 %v1685
        %v1801 = vpop.f32.mrf.mxu0
        %v1802 = vadd.f32 %v1616, %v1801
        %1803 = vmatmul.f32.gmra.mxu0 %v1688
        %v1804 = vpop.f32.mrf.mxu0
        %v1805 = vadd.f32 %v1616, %v1804
        %1806 = vmatmul.f32.gmra.mxu0 %v1691
        %v1807 = vpop.f32.mrf.mxu0
        %v1808 = vadd.f32 %v1616, %v1807
        %1809 = vmatmul.f32.gmra.mxu0 %v1694
        %v1810 = vpop.f32.mrf.mxu0
        %v1811 = vadd.f32 %v1616, %v1810
        %1812 = vmatmul.f32.gmra.mxu0 %v1697
        %v1813 = vpop.f32.mrf.mxu0
        %v1814 = vadd.f32 %v1616, %v1813
        %1815 = vmatmul.f32.gmra.mxu0 %v1700
        %v1816 = vpop.f32.mrf.mxu0
        %v1817 = vadd.f32 %v1616, %v1816
        %1818 = vmatmul.f32.gmra.mxu0 %v1703
        %v1819 = vpop.f32.mrf.mxu0
        %v1820 = vadd.f32 %v1616, %v1819
        %1821 = vmatmul.f32.gmra.mxu0 %v1706
        %v1822 = vpop.f32.mrf.mxu0
        %v1823 = vadd.f32 %v1616, %v1822
        %1824 = vmatmul.f32.gmra.mxu0 %v1709
        %v1825 = vpop.f32.mrf.mxu0
        %v1826 = vadd.f32 %v1616, %v1825
        %1827 = vmatmul.f32.gmra.mxu0 %v1712
        %v1828 = vpop.f32.mrf.mxu0
        %v1829 = vadd.f32 %v1616, %v1828
        %1830 = vdwg.mxu0
        %v1831 = vadd.f32 %v1736, %v299
        %v1832 = vadd.f32 %v1739, %v300
        %v1833 = vadd.f32 %v1742, %v301
        %v1834 = vadd.f32 %v1745, %v302
        %v1835 = vadd.f32 %v1748, %v303
        %v1836 = vadd.f32 %v1751, %v304
        %v1837 = vadd.f32 %v1754, %v305
        %v1838 = vadd.f32 %v1757, %v306
        %v1839 = vadd.f32 %v1760, %v307
        %v1840 = vadd.f32 %v1763, %v308
        %v1841 = vadd.f32 %v1766, %v309
        %v1842 = vadd.f32 %v1769, %v310
        %v1843 = vadd.f32 %v1772, %v311
        %v1844 = vadd.f32 %v1775, %v312
        %v1845 = vadd.f32 %v1778, %v313
        %v1846 = vadd.f32 %v1781, %v314
        %v1847 = vadd.f32 %v1784, %v315
        %v1848 = vadd.f32 %v1787, %v316
        %v1849 = vadd.f32 %v1790, %v317
        %v1850 = vadd.f32 %v1793, %v318
        %v1851 = vadd.f32 %v1796, %v319
        %v1852 = vadd.f32 %v1799, %v320
        %v1853 = vadd.f32 %v1802, %v321
        %v1854 = vadd.f32 %v1805, %v322
        %v1855 = vadd.f32 %v1808, %v323
        %v1856 = vadd.f32 %v1811, %v324
        %v1857 = vadd.f32 %v1814, %v325
        %v1858 = vadd.f32 %v1817, %v326
        %v1859 = vadd.f32 %v1820, %v327
        %v1860 = vadd.f32 %v1823, %v328
        %v1861 = vadd.f32 %v1826, %v329
        %v1862 = vadd.f32 %v1829, %v330
        %v1863 = vmax.f32 %v1831, 0.0
        %v1864 = vmax.f32 %v1832, 0.0
        %v1865 = vmax.f32 %v1833, 0.0
        %v1866 = vmax.f32 %v1834, 0.0
        %v1867 = vmax.f32 %v1835, 0.0
        %v1868 = vmax.f32 %v1836, 0.0
        %v1869 = vmax.f32 %v1837, 0.0
        %v1870 = vmax.f32 %v1838, 0.0
        %v1871 = vmax.f32 %v1839, 0.0
        %v1872 = vmax.f32 %v1840, 0.0
        %v1873 = vmax.f32 %v1841, 0.0
        %v1874 = vmax.f32 %v1842, 0.0
        %v1875 = vmax.f32 %v1843, 0.0
        %v1876 = vmax.f32 %v1844, 0.0
        %v1877 = vmax.f32 %v1845, 0.0
        %v1878 = vmax.f32 %v1846, 0.0
        %v1879 = vmax.f32 %v1847, 0.0
        %v1880 = vmax.f32 %v1848, 0.0
        %v1881 = vmax.f32 %v1849, 0.0
        %v1882 = vmax.f32 %v1850, 0.0
        %v1883 = vmax.f32 %v1851, 0.0
        %v1884 = vmax.f32 %v1852, 0.0
        %v1885 = vmax.f32 %v1853, 0.0
        %v1886 = vmax.f32 %v1854, 0.0
        %v1887 = vmax.f32 %v1855, 0.0
        %v1888 = vmax.f32 %v1856, 0.0
        %v1889 = vmax.f32 %v1857, 0.0
        %v1890 = vmax.f32 %v1858, 0.0
        %v1891 = vmax.f32 %v1859, 0.0
        %v1892 = vmax.f32 %v1860, 0.0
        %v1893 = vmax.f32 %v1861, 0.0
        %v1894 = vmax.f32 %v1862, 0.0
        %1895 = vst.msk [vmem:[%s298] sm:$0xff] %vm337, %v1863
        %1896 = vst.msk [vmem:[%s298 + $0x8] sm:$0xff] %vm337, %v1864
        %1897 = vst.msk [vmem:[%s298 + $0x10] sm:$0xff] %vm337, %v1865
        %1898 = vst.msk [vmem:[%s298 + $0x18] sm:$0xff] %vm337, %v1866
        %1899 = vst.msk [vmem:[%s298 + $0x20] sm:$0xff] %vm337, %v1867
        %1900 = vst.msk [vmem:[%s298 + $0x28] sm:$0xff] %vm337, %v1868
        %1901 = vst.msk [vmem:[%s298 + $0x30] sm:$0xff] %vm337, %v1869
        %1902 = vst.msk [vmem:[%s298 + $0x38] sm:$0xff] %vm337, %v1870
        %1903 = vst.msk [vmem:[%s298 + $0x40] sm:$0xff] %vm337, %v1871
        %1904 = vst.msk [vmem:[%s298 + $0x48] sm:$0xff] %vm337, %v1872
        %1905 = vst.msk [vmem:[%s298 + $0x50] sm:$0xff] %vm337, %v1873
        %1906 = vst.msk [vmem:[%s298 + $0x58] sm:$0xff] %vm337, %v1874
        %1907 = vst.msk [vmem:[%s298 + $0x60] sm:$0xff] %vm337, %v1875
        %1908 = vst.msk [vmem:[%s298 + $0x68] sm:$0xff] %vm337, %v1876
        %1909 = vst.msk [vmem:[%s298 + $0x70] sm:$0xff] %vm337, %v1877
        %1910 = vst.msk [vmem:[%s298 + $0x78] sm:$0xff] %vm337, %v1878
        %1911 = vst.msk [vmem:[%s298 + $0x80] sm:$0xff] %vm337, %v1879
        %1912 = vst.msk [vmem:[%s298 + $0x88] sm:$0xff] %vm337, %v1880
        %1913 = vst.msk [vmem:[%s298 + $0x90] sm:$0xff] %vm337, %v1881
        %1914 = vst.msk [vmem:[%s298 + $0x98] sm:$0xff] %vm337, %v1882
        %1915 = vst.msk [vmem:[%s298 + $0xa0] sm:$0xff] %vm337, %v1883
        %1916 = vst.msk [vmem:[%s298 + $0xa8] sm:$0xff] %vm337, %v1884
        %1917 = vst.msk [vmem:[%s298 + $0xb0] sm:$0xff] %vm337, %v1885
        %1918 = vst.msk [vmem:[%s298 + $0xb8] sm:$0xff] %vm337, %v1886
        %1919 = vst.msk [vmem:[%s298 + $0xc0] sm:$0xff] %vm337, %v1887
        %1920 = vst.msk [vmem:[%s298 + $0xc8] sm:$0xff] %vm337, %v1888
        %1921 = vst.msk [vmem:[%s298 + $0xd0] sm:$0xff] %vm337, %v1889
        %1922 = vst.msk [vmem:[%s298 + $0xd8] sm:$0xff] %vm337, %v1890
        %1923 = vst.msk [vmem:[%s298 + $0xe0] sm:$0xff] %vm337, %v1891
        %1924 = vst.msk [vmem:[%s298 + $0xe8] sm:$0xff] %vm337, %v1892
        %1925 = vst.msk [vmem:[%s298 + $0xf0] sm:$0xff] %vm337, %v1893
        %1926 = vst.msk [vmem:[%s298 + $0xf8] sm:$0xff] %vm337, %v1894
        %s1927 = sand.u32 %s184, 1
        %s1928 = scalar_lea.sflag [#allocation5], %s1927
        %s1929 = sand.u32 %s184, 1
        %s1930 = smul.addr %s1929, 256
        %s1931 = scalar_lea.vmem [#allocation6], %s1930
        // Predicated region
        $region53: #{tpu_custom_call.1} parent=47 // pred_check
          %p1932 = pneg %p194
        $region54: #{tpu_custom_call.1} parent=47 // pred_check_branch
          %1934 = sbr.rel (%p1932) target = $region56
        $region55: #{tpu_custom_call.1} parent=47 // pred_region
          %1936 = vsyncadd %s1928, 0
          %s1937 = smul.addr %s24, 32
          %s1938 = smul.addr %s1937, 8
          %s1939 = scalar_lea.hbm %s7, %s1938
          %s1940 = sshll.u32 %s1931, 4
          %s1941 = int_to_ptr.vmem [resolvable:$true] %s1940
          %s1942 = sshll.u32 %s1939, 4
          %s1943 = int_to_ptr.hbm [resolvable:$true] %s1942
          %1948 = dma.vmem_to_hbm [thread:$0]  %s1941, 4096, %s1943, %s1928, 128, 128, 8
        $region56: #{tpu_custom_call.1} parent=47 // pred_fallthru
          _
      $region48: #{tpu_custom_call.1} parent=5 // pred_fallthru
        _
      %p1949 = scmp.le.s32.totalorder 2, %s19
      // Predicated region
      $region57: #{tpu_custom_call.1} parent=5 // pred_check
        %p1950 = pneg %p1949
      $region58: #{tpu_custom_call.1} parent=5 // pred_check_branch
        %1952 = sbr.rel (%p1950) target = $region60
      $region59: #{tpu_custom_call.1} parent=5 // pred_region
        %s1953 = ssub.s32 %s19, 2
        // Predicated region
        $region61: #{tpu_custom_call.1} parent=59 // pred_check
          %p1954 = pneg %p200
        $region62: #{tpu_custom_call.1} parent=59 // pred_check_branch
          %1956 = sbr.rel (%p1954) target = $region64
        $region63: #{tpu_custom_call.1} parent=59 // pred_region
          %s1957 = sand.u32 %s185, 1
          %s1958 = scalar_lea.sflag [#allocation5], %s1957
          %s1959 = sand.u32 %s185, 1
          %s1960 = smul.addr %s1959, 256
          %s1961 = scalar_lea.vmem [#allocation6], %s1960
          %1963 = dma.done %s1958, 4096
        $region64: #{tpu_custom_call.1} parent=59 // pred_fallthru
          _
      $region60: #{tpu_custom_call.1} parent=5 // pred_fallthru
        _
    $region6: #{tpu_custom_call.1} parent=1 // loop_footer
      %s23 = sadd.s32 1, %s19
    $region7: #{tpu_custom_call.1} parent=1 // loop_footer_branch
      %18 = sbr.rel target = $region3
    $region8: #{tpu_custom_call.1} parent=1 // loop_exit
      _
    %1964 = vsyncpa [#allocation4], 1
    %s1965 = scalar_lea.sflag [#allocation4], 1
    %1966 = vsyncpa %s1965, 1
    %1967 = vsyncpa [#allocation5], 1
    %s1968 = scalar_lea.sflag [#allocation5], 1
    %1969 = vsyncpa %s1968, 1

</llo_original>
